<compile_context>
chip_gen: v5e
topology: v5e:2x2
jax: 0.10.0
libtpu: 0.0.40
codegen_flags: <defaults>
</compile_context>

<pallas_src>
import functools

import jax
import jax.numpy as jnp
from jax.experimental import pallas as pl
from jax.experimental.pallas import tpu as pltpu


def _layernorm(x, gamma, beta, eps=1e-6):
    mu = jnp.mean(x, axis=-1, keepdims=True)
    xc = x - mu
    var = jnp.mean(xc * xc, axis=-1, keepdims=True)
    return xc * jax.lax.rsqrt(var + eps) * gamma + beta


def _gelu_tanh(x):
    c = 0.7978845608028654  # sqrt(2/pi)
    return 0.5 * x * (1.0 + jnp.tanh(c * (x + 0.044715 * x * x * x)))


def _split_heads_bf16(x2d, num_heads, head_dim):
    """(rows, nh*hd) -> (nh, rows, hd); cast to bf16 BEFORE the relayout so the
    sub-128-lane transpose moves half the bytes."""
    rows = x2d.shape[0]
    x3 = x2d.astype(jnp.bfloat16).reshape(rows, num_heads, head_dim)
    return jnp.swapaxes(x3, 0, 1)


def _encoder_block_kernel(num_heads, head_dim, scale, seq_len, valid_len,
                          block_q, vis, cache_kv,
                          x_ref, vec_ref, b1_ref,
                          wq_ref, wk_ref, wv_ref, wo_ref, w1_ref, w2_ref,
                          out_ref, *rest):
    f32, bf16 = jnp.float32, jnp.bfloat16

    idx = 0
    attn_ref = None
    if vis:
        attn_ref = rest[idx]
        idx += 1
    if cache_kv:
        xn_scr, k_scr, v_scr = rest[idx], rest[idx + 1], rest[idx + 2]

    vecs = vec_ref[...]                               # (9, H) f32, packed params
    g1, be1 = vecs[0:1], vecs[1:2]                    # attn LayerNorm gamma/beta
    bq, bk, bv, bo = vecs[2:3], vecs[3:4], vecs[4:5], vecs[5:6]
    g2, be2 = vecs[6:7], vecs[7:8]                    # mlp LayerNorm gamma/beta
    b2 = vecs[8:9]                                    # fc2 bias
    b1 = b1_ref[...]                                  # (1, mlp_dim)

    def project_kv(xn_bf):
        k = jnp.dot(xn_bf, wk_ref[...], preferred_element_type=f32) + bk
        v = jnp.dot(xn_bf, wv_ref[...], preferred_element_type=f32) + bv
        return (_split_heads_bf16(k, num_heads, head_dim),
                _split_heads_bf16(v, num_heads, head_dim))

    if cache_kv:
        # K/V and the full-sequence LayerNorm are computed exactly once per
        # batch element (t == 0) and cached in VMEM scratch; later query tiles
        # only slice them (grid t-axis is "arbitrary").
        @pl.when(pl.program_id(1) == 0)
        def _():
            xn_f = _layernorm(x_ref[0], g1, be1)               # (S, H) f32
            xn_scr[...] = xn_f
            k3_, v3_ = project_kv(xn_f.astype(bf16))
            k_scr[...] = k3_
            v_scr[...] = v3_
        k3, v3 = k_scr[...], v_scr[...]
        q0 = pl.multiple_of(pl.program_id(1) * block_q, block_q)
        x_tile = x_ref[0, pl.ds(q0, block_q), :]               # (TQ, H) f32
        xn_tile_bf = xn_scr[pl.ds(q0, block_q), :].astype(bf16)
    else:
        x_tile = x_ref[0]                                      # (S, H) f32
        xn_tile_bf = _layernorm(x_tile, g1, be1).astype(bf16)
        k3, v3 = project_kv(xn_tile_bf)

    # --- Q projection: 1/sqrt(head_dim) folded in once; bf16 ops, f32 accum.
    q = (jnp.dot(xn_tile_bf, wq_ref[...], preferred_element_type=f32) + bq) * scale
    q3 = _split_heads_bf16(q, num_heads, head_dim)             # (nh, TQ, hd)

    # --- head-batched attention.
    s = jnp.einsum('nqd,nkd->nqk', q3, k3, preferred_element_type=f32)  # (nh,TQ,S)
    if valid_len < seq_len:                                    # key-padding mask
        key_mask = jax.lax.broadcasted_iota(jnp.int32, (1, 1, seq_len), 2) < valid_len
        s = jnp.where(key_mask, s, jnp.float32(-1e30))
    s = s - jnp.max(s, axis=-1, keepdims=True)
    p = jnp.exp(s)
    p = p * pl.reciprocal(jnp.sum(p, axis=-1, keepdims=True), approx=True)
    p_bf = p.astype(bf16)                                      # reused for vis + PV

    if vis:
        attn_ref[0] = p_bf if attn_ref.dtype == p_bf.dtype else p.astype(attn_ref.dtype)

    ctx = jnp.einsum('nqk,nkd->nqd', p_bf, v3, preferred_element_type=f32)
    ctx = jnp.swapaxes(ctx.astype(bf16), 0, 1).reshape(block_q, num_heads * head_dim)

    attn_out = jnp.dot(ctx, wo_ref[...], preferred_element_type=f32) + bo
    h1 = x_tile + attn_out                                     # residual 1 (f32)

    # --- MLP branch.
    hn = _layernorm(h1, g2, be2).astype(bf16)
    m = jnp.dot(hn, w1_ref[...], preferred_element_type=f32) + b1
    m = _gelu_tanh(m).astype(bf16)
    mo = jnp.dot(m, w2_ref[...], preferred_element_type=f32) + b2
    out_ref[0] = (h1 + mo).astype(out_ref.dtype)               # residual 2


def encoder_block(x, params, *, num_heads, head_dim, vis=False, block_q=None,
                  vis_dtype=jnp.bfloat16, vmem_limit_bytes=None):
    """x: (B, S, H) f32.  Returns (out (B,S,H), vis_weights (B,nh,S,S) or None)."""
    B, S, H = x.shape
    assert num_heads * head_dim == H
    mlp_dim = params["w1"].shape[1]
    scale = float(head_dim) ** (-0.5)

    # Pad S: lane multiple (x128) when large so ViT-B's 197 -> 256 presents
    # M=256 tiles to the 256-wide MXU (v6e/v7x); sublane multiple (x8) otherwise.
    # Padded keys are masked in-kernel; padded query rows are sliced off below.
    pad_to = 128 if S > 128 else 8
    s_pad = -(-S // pad_to) * pad_to
    x_in = jnp.pad(x, ((0, 0), (0, s_pad - S), (0, 0))) if s_pad != S else x

    if block_q is None:
        # Full-sequence tile: LayerNorm and K/V computed exactly once.
        # TODO(synk): for B == 1 on v7x pass block_q = s_pad // 2 (or split the
        # head axis) so both TensorCores get a grid point.
        block_q = s_pad
    assert s_pad % block_q == 0
    nq = s_pad // block_q
    cache_kv = nq > 1

    f32, bf16 = jnp.float32, jnp.bfloat16

    def row(v, n):
        return jnp.asarray(v, f32).reshape(1, n)

    # Pack the nine (1, H) parameter vectors into a single (9, H) input.
    vecs = jnp.concatenate([
        row(params["ln1_g"], H), row(params["ln1_b"], H),
        row(params["bq"], H), row(params["bk"], H),
        row(params["bv"], H), row(params["bo"], H),
        row(params["ln2_g"], H), row(params["ln2_b"], H),
        row(params["b2"], H),
    ], axis=0)
    b1 = row(params["b1"], mlp_dim)

    wq = params["wq"].astype(bf16)
    wk = params["wk"].astype(bf16)
    wv = params["wv"].astype(bf16)
    wo = params["wo"].astype(bf16)
    w1 = params["w1"].astype(bf16)
    w2 = params["w2"].astype(bf16)

    kernel = functools.partial(_encoder_block_kernel, num_heads, head_dim,
                               scale, s_pad, S, block_q, vis, cache_kv)

    def rep(shape):
        # Resident parameter blocks: index never changes -> single buffer
        # (no double-buffering) saves VMEM; matters most on v7x (64 MiB part).
        return pl.BlockSpec(shape, lambda b, t: (0,) * len(shape),
                            pipeline_mode=pl.Buffered(1))

    in_specs = [
        pl.BlockSpec((1, s_pad, H), lambda b, t: (b, 0, 0)),   # x (full seq / batch)
        rep((9, H)),                                           # packed LN/bias rows
        rep((1, mlp_dim)),                                     # fc1 bias
        rep((H, H)), rep((H, H)), rep((H, H)), rep((H, H)),    # Wq Wk Wv Wo
        rep((H, mlp_dim)), rep((mlp_dim, H)),                  # fc1 fc2
    ]
    out_shape = [jax.ShapeDtypeStruct((B, s_pad, H), x.dtype)]
    out_specs = [pl.BlockSpec((1, block_q, H), lambda b, t: (b, t, 0))]
    if vis:
        out_shape.append(jax.ShapeDtypeStruct((B, num_heads, s_pad, s_pad), vis_dtype))
        out_specs.append(pl.BlockSpec((1, num_heads, block_q, s_pad),
                                      lambda b, t: (b, 0, t, 0)))

    scratch_shapes = []
    if cache_kv:
        scratch_shapes = [
            pltpu.VMEM((s_pad, H), f32),                       # cached LayerNorm(x)
            pltpu.VMEM((num_heads, s_pad, head_dim), bf16),    # cached K heads
            pltpu.VMEM((num_heads, s_pad, head_dim), bf16),    # cached V heads
        ]

    if vmem_limit_bytes is None:
        try:
            phys = int(pltpu.get_tpu_info().vmem_capacity_bytes)
        except Exception:
            phys = 128 * 1024 * 1024
        # ~40 MiB on v7x (64 MiB), ~80 MiB on v5e / v6e (128 MiB), capped at 96 MiB.
        vmem_limit_bytes = min((phys * 5) // 8, 96 * 1024 * 1024)

    itemsize = jnp.dtype(x.dtype).itemsize
    flops = B * (8 * s_pad * H * H
                 + 4 * s_pad * s_pad * H
                 + 4 * s_pad * H * mlp_dim)
    transcendentals = B * (num_heads * s_pad * s_pad + s_pad * mlp_dim)
    bytes_accessed = (2 * B * s_pad * H * itemsize                     # x in + out
                      + (4 * H * H + 2 * H * mlp_dim) * 2              # bf16 weights
                      + (9 * H + mlp_dim) * 4)                         # packed vectors
    if vis:
        bytes_accessed += B * num_heads * s_pad * s_pad * jnp.dtype(vis_dtype).itemsize

    res = pl.pallas_call(
        kernel,
        out_shape=tuple(out_shape),
        grid_spec=pltpu.PrefetchScalarGridSpec(
            num_scalar_prefetch=0,
            grid=(B, nq),
            in_specs=in_specs,
            out_specs=tuple(out_specs),
            scratch_shapes=tuple(scratch_shapes)),
        compiler_params=pltpu.CompilerParams(
            dimension_semantics=("parallel", "arbitrary" if cache_kv else "parallel"),
            vmem_limit_bytes=int(vmem_limit_bytes)),
        cost_estimate=pl.CostEstimate(flops=int(flops),
                                      transcendentals=int(transcendentals),
                                      bytes_accessed=int(bytes_accessed)),
    )(x_in, vecs, b1, wq, wk, wv, wo, w1, w2)

    if vis:
        out, attn = res
    else:
        (out,) = res
        attn = None
    if s_pad != S:
        out = out[:, :S, :]
        if attn is not None:
            attn = attn[:, :, :S, :S]
    return out, attn


def _reference(x, params, *, num_heads, head_dim):
    """Plain-JAX (f32) reference mirroring the PyTorch EncoderBlock (eval mode)."""
    B, S, H = x.shape
    scale = float(head_dim) ** (-0.5)

    def ln(a, g, b):
        mu = a.mean(-1, keepdims=True)
        var = ((a - mu) ** 2).mean(-1, keepdims=True)
        return (a - mu) / jnp.sqrt(var + 1e-6) * g + b

    xn = ln(x, params["ln1_g"], params["ln1_b"])
    q = (xn @ params["wq"] + params["bq"]).reshape(B, S, num_heads, head_dim).transpose(0, 2, 1, 3)
    k = (xn @ params["wk"] + params["bk"]).reshape(B, S, num_heads, head_dim).transpose(0, 2, 1, 3)
    v = (xn @ params["wv"] + params["bv"]).reshape(B, S, num_heads, head_dim).transpose(0, 2, 1, 3)
    w = jax.nn.softmax(jnp.einsum("bhqd,bhkd->bhqk", q, k) * scale, axis=-1)
    o = jnp.einsum("bhqk,bhkd->bhqd", w, v).transpose(0, 2, 1, 3).reshape(B, S, H)
    h1 = x + (o @ params["wo"] + params["bo"])
    hn = ln(h1, params["ln2_g"], params["ln2_b"])
    m = jax.nn.gelu(hn @ params["w1"] + params["b1"], approximate=False)
    out = h1 + (m @ params["w2"] + params["b2"])
    return out, w


if __name__ == "__main__":
    # Small shapes consistent with the module: hidden = head_num * head_dim.
    B, H = 2, 32
    NUM_HEADS, HEAD_DIM = 4, 8
    MLP_DIM = 4 * H

    key = jax.random.PRNGKey(0)
    ks = jax.random.split(key, 18)

    def lin_init(kw, kb, fan_in, fan_out):
        w = jax.random.normal(kw, (fan_in, fan_out), jnp.float32) * (fan_in ** -0.5)
        b = jax.random.normal(kb, (1, fan_out), jnp.float32) * 0.01
        return w, b

    wq, bq = lin_init(ks[1], ks[2], H, H)
    wk, bk = lin_init(ks[3], ks[4], H, H)
    wv, bv = lin_init(ks[5], ks[6], H, H)
    wo, bo = lin_init(ks[7], ks[8], H, H)
    w1, b1 = lin_init(ks[9], ks[10], H, MLP_DIM)
    w2, b2 = lin_init(ks[11], ks[12], MLP_DIM, H)

    params = dict(
        ln1_g=1.0 + 0.1 * jax.random.normal(ks[13], (1, H), jnp.float32),
        ln1_b=0.1 * jax.random.normal(ks[14], (1, H), jnp.float32),
        ln2_g=1.0 + 0.1 * jax.random.normal(ks[15], (1, H), jnp.float32),
        ln2_b=0.1 * jax.random.normal(ks[16], (1, H), jnp.float32),
        wq=wq, bq=bq, wk=wk, bk=bk, wv=wv, bv=bv, wo=wo, bo=bo,
        w1=w1, b1=b1, w2=w2, b2=b2,
    )

    def check(seq_len, block_q):
        x = jax.random.normal(jax.random.fold_in(ks[17], seq_len),
                              (B, seq_len, H), dtype=jnp.float32)
        out, attn = encoder_block(x, params, num_heads=NUM_HEADS,
                                  head_dim=HEAD_DIM, vis=True, block_q=block_q)
        jax.block_until_ready((out, attn))
        ref_out, ref_attn = _reference(x, params, num_heads=NUM_HEADS,
                                       head_dim=HEAD_DIM)
        # Tolerances cover bf16 matmuls / bf16 vis weights / approx reciprocal /
        # tanh-GELU vs the f32 erf-GELU reference; real bugs give O(1) errors.
        assert jnp.allclose(attn.astype(jnp.float32), ref_attn,
                            atol=2e-2, rtol=2e-2), f"attn mismatch (S={seq_len})"
        assert jnp.allclose(out, ref_out, atol=1e-1, rtol=1e-1), \
            f"output mismatch (S={seq_len})"

    check(seq_len=8, block_q=None)   # default path: single full-sequence tile
    check(seq_len=13, block_q=8)     # padding + key mask + cached-K/V multi-tile path

    print("KERNEL_OK")
</pallas_src>

<mosaic_0001>
module attributes {stable_mosaic.version = 11 : i64} {
  func.func @_encoder_block_kernel(%arg0: i32, %arg1: i32, %arg2: memref<1x8x32xf32, #tpu.memory_space<vmem>>, %arg3: memref<9x32xf32, #tpu.memory_space<vmem>>, %arg4: memref<1x128xf32, #tpu.memory_space<vmem>>, %arg5: memref<32x32xbf16, #tpu.memory_space<vmem>>, %arg6: memref<32x32xbf16, #tpu.memory_space<vmem>>, %arg7: memref<32x32xbf16, #tpu.memory_space<vmem>>, %arg8: memref<32x32xbf16, #tpu.memory_space<vmem>>, %arg9: memref<32x128xbf16, #tpu.memory_space<vmem>>, %arg10: memref<128x32xbf16, #tpu.memory_space<vmem>>, %arg11: memref<1x8x32xf32, #tpu.memory_space<vmem>>, %arg12: memref<1x4x8x8xbf16, #tpu.memory_space<vmem>>) attributes {dimension_semantics = [#tpu.dimension_semantics<parallel>, #tpu.dimension_semantics<parallel>], iteration_bounds = array<i64: 2, 1>, scalar_prefetch = 0 : i64, scratch_operands = 0 : i64, tpu.core_type = #tpu.core_type<tc>, window_params = [{transform_indices = @transform_0, window_bounds = array<i64: 1, 8, 32>}, {pipeline_mode = #tpu.pipeline_mode<synchronous>, transform_indices = @transform_1, window_bounds = array<i64: 9, 32>}, {pipeline_mode = #tpu.pipeline_mode<synchronous>, transform_indices = @transform_2, window_bounds = array<i64: 1, 128>}, {pipeline_mode = #tpu.pipeline_mode<synchronous>, transform_indices = @transform_3, window_bounds = array<i64: 32, 32>}, {pipeline_mode = #tpu.pipeline_mode<synchronous>, transform_indices = @transform_4, window_bounds = array<i64: 32, 32>}, {pipeline_mode = #tpu.pipeline_mode<synchronous>, transform_indices = @transform_5, window_bounds = array<i64: 32, 32>}, {pipeline_mode = #tpu.pipeline_mode<synchronous>, transform_indices = @transform_6, window_bounds = array<i64: 32, 32>}, {pipeline_mode = #tpu.pipeline_mode<synchronous>, transform_indices = @transform_7, window_bounds = array<i64: 32, 128>}, {pipeline_mode = #tpu.pipeline_mode<synchronous>, transform_indices = @transform_8, window_bounds = array<i64: 128, 32>}, {transform_indices = @transform_9, window_bounds = array<i64: 1, 8, 32>}, {transform_indices = @transform_10, window_bounds = array<i64: 1, 4, 8, 8>}]} {
    %c0 = arith.constant 0 : index
    %c0_0 = arith.constant 0 : index
    %0 = vector.load %arg3[%c0, %c0_0] : memref<9x32xf32, #tpu.memory_space<vmem>>, vector<9x32xf32>
    %1 = vector.extract_strided_slice %0 {offsets = [0, 0], sizes = [1, 32], strides = [1, 1]} : vector<9x32xf32> to vector<1x32xf32>
    %2 = vector.extract_strided_slice %0 {offsets = [1, 0], sizes = [1, 32], strides = [1, 1]} : vector<9x32xf32> to vector<1x32xf32>
    %3 = vector.extract_strided_slice %0 {offsets = [2, 0], sizes = [1, 32], strides = [1, 1]} : vector<9x32xf32> to vector<1x32xf32>
    %4 = vector.extract_strided_slice %0 {offsets = [3, 0], sizes = [1, 32], strides = [1, 1]} : vector<9x32xf32> to vector<1x32xf32>
    %5 = vector.extract_strided_slice %0 {offsets = [4, 0], sizes = [1, 32], strides = [1, 1]} : vector<9x32xf32> to vector<1x32xf32>
    %6 = vector.extract_strided_slice %0 {offsets = [5, 0], sizes = [1, 32], strides = [1, 1]} : vector<9x32xf32> to vector<1x32xf32>
    %7 = vector.extract_strided_slice %0 {offsets = [6, 0], sizes = [1, 32], strides = [1, 1]} : vector<9x32xf32> to vector<1x32xf32>
    %8 = vector.extract_strided_slice %0 {offsets = [7, 0], sizes = [1, 32], strides = [1, 1]} : vector<9x32xf32> to vector<1x32xf32>
    %9 = vector.extract_strided_slice %0 {offsets = [8, 0], sizes = [1, 32], strides = [1, 1]} : vector<9x32xf32> to vector<1x32xf32>
    %c0_1 = arith.constant 0 : index
    %c0_2 = arith.constant 0 : index
    %10 = vector.load %arg4[%c0_1, %c0_2] : memref<1x128xf32, #tpu.memory_space<vmem>>, vector<1x128xf32>
    %c0_3 = arith.constant 0 : index
    %c0_4 = arith.constant 0 : index
    %c0_5 = arith.constant 0 : index
    %11 = vector.load %arg2[%c0_3, %c0_4, %c0_5] : memref<1x8x32xf32, #tpu.memory_space<vmem>>, vector<1x8x32xf32>
    %12 = vector.shape_cast %11 : vector<1x8x32xf32> to vector<8x32xf32>
    %cst = arith.constant dense<0.000000e+00> : vector<8xf32>
    %13 = vector.multi_reduction <add>, %12, %cst [1] : vector<8x32xf32> to vector<8xf32>
    %14 = vector.shape_cast %13 : vector<8xf32> to vector<8x1xf32>
    %cst_6 = arith.constant 3.200000e+01 : f32
    %15 = vector.broadcast %cst_6 : f32 to vector<8x1xf32>
    %16 = arith.divf %14, %15 : vector<8x1xf32>
    %17 = vector.broadcast %16 : vector<8x1xf32> to vector<8x32xf32>
    %18 = arith.subf %12, %17 : vector<8x32xf32>
    %19 = arith.mulf %18, %18 : vector<8x32xf32>
    %cst_7 = arith.constant dense<0.000000e+00> : vector<8xf32>
    %20 = vector.multi_reduction <add>, %19, %cst_7 [1] : vector<8x32xf32> to vector<8xf32>
    %21 = vector.shape_cast %20 : vector<8xf32> to vector<8x1xf32>
    %cst_8 = arith.constant 3.200000e+01 : f32
    %22 = vector.broadcast %cst_8 : f32 to vector<8x1xf32>
    %23 = arith.divf %21, %22 : vector<8x1xf32>
    %cst_9 = arith.constant 9.99999997E-7 : f32
    %24 = vector.broadcast %cst_9 : f32 to vector<8x1xf32>
    %25 = arith.addf %23, %24 : vector<8x1xf32>
    %26 = math.rsqrt %25 : vector<8x1xf32>
    %27 = vector.broadcast %26 : vector<8x1xf32> to vector<8x32xf32>
    %28 = arith.mulf %18, %27 : vector<8x32xf32>
    %29 = vector.broadcast %1 : vector<1x32xf32> to vector<8x32xf32>
    %30 = arith.mulf %28, %29 : vector<8x32xf32>
    %31 = vector.broadcast %2 : vector<1x32xf32> to vector<8x32xf32>
    %32 = arith.addf %30, %31 : vector<8x32xf32>
    %33 = arith.truncf %32 : vector<8x32xf32> to vector<8x32xbf16>
    %c0_10 = arith.constant 0 : index
    %c0_11 = arith.constant 0 : index
    %34 = vector.load %arg6[%c0_10, %c0_11] : memref<32x32xbf16, #tpu.memory_space<vmem>>, vector<32x32xbf16>
    %cst_12 = arith.constant dense<0.000000e+00> : vector<8x32xf32>
    %35 = tpu.matmul %33, %34, %cst_12 {dimension_numbers = #tpu.dot_dimension_numbers<[1], [0], [0], [1], [0, 0, 1, 1], [], []>} : vector<8x32xbf16>, vector<32x32xbf16>, vector<8x32xf32> -> vector<8x32xf32>
    %36 = vector.broadcast %4 : vector<1x32xf32> to vector<8x32xf32>
    %37 = arith.addf %35, %36 : vector<8x32xf32>
    %c0_13 = arith.constant 0 : index
    %c0_14 = arith.constant 0 : index
    %38 = vector.load %arg7[%c0_13, %c0_14] : memref<32x32xbf16, #tpu.memory_space<vmem>>, vector<32x32xbf16>
    %cst_15 = arith.constant dense<0.000000e+00> : vector<8x32xf32>
    %39 = tpu.matmul %33, %38, %cst_15 {dimension_numbers = #tpu.dot_dimension_numbers<[1], [0], [0], [1], [0, 0, 1, 1], [], []>} : vector<8x32xbf16>, vector<32x32xbf16>, vector<8x32xf32> -> vector<8x32xf32>
    %40 = vector.broadcast %5 : vector<1x32xf32> to vector<8x32xf32>
    %41 = arith.addf %39, %40 : vector<8x32xf32>
    %42 = arith.truncf %37 : vector<8x32xf32> to vector<8x32xbf16>
    %43 = vector.shape_cast %42 : vector<8x32xbf16> to vector<8x4x8xbf16>
    %44 = tpu.transpose %43, [1, 0, 2] : vector<8x4x8xbf16> -> vector<4x8x8xbf16>
    %45 = arith.truncf %41 : vector<8x32xf32> to vector<8x32xbf16>
    %46 = vector.shape_cast %45 : vector<8x32xbf16> to vector<8x4x8xbf16>
    %47 = tpu.transpose %46, [1, 0, 2] : vector<8x4x8xbf16> -> vector<4x8x8xbf16>
    %c0_16 = arith.constant 0 : index
    %c0_17 = arith.constant 0 : index
    %48 = vector.load %arg5[%c0_16, %c0_17] : memref<32x32xbf16, #tpu.memory_space<vmem>>, vector<32x32xbf16>
    %cst_18 = arith.constant dense<0.000000e+00> : vector<8x32xf32>
    %49 = tpu.matmul %33, %48, %cst_18 {dimension_numbers = #tpu.dot_dimension_numbers<[1], [0], [0], [1], [0, 0, 1, 1], [], []>} : vector<8x32xbf16>, vector<32x32xbf16>, vector<8x32xf32> -> vector<8x32xf32>
    %50 = vector.broadcast %3 : vector<1x32xf32> to vector<8x32xf32>
    %51 = arith.addf %49, %50 : vector<8x32xf32>
    %cst_19 = arith.constant 0.353553385 : f32
    %52 = vector.broadcast %cst_19 : f32 to vector<8x32xf32>
    %53 = arith.mulf %51, %52 : vector<8x32xf32>
    %54 = arith.truncf %53 : vector<8x32xf32> to vector<8x32xbf16>
    %55 = vector.shape_cast %54 : vector<8x32xbf16> to vector<8x4x8xbf16>
    %56 = tpu.transpose %55, [1, 0, 2] : vector<8x4x8xbf16> -> vector<4x8x8xbf16>
    "tpu.trace_start"() <{level = 10 : i32, message = "nqd,nkd->nqk"}> : () -> ()
    %cst_20 = arith.constant dense<0.000000e+00> : vector<4x8x8xf32>
    %57 = tpu.matmul %56, %44, %cst_20 {dimension_numbers = #tpu.dot_dimension_numbers<[2], [2], [1], [1], [0, 0, 0, 1, 1, 1], [0], [0]>} : vector<4x8x8xbf16>, vector<4x8x8xbf16>, vector<4x8x8xf32> -> vector<4x8x8xf32>
    "tpu.trace_stop"() : () -> ()
    %cst_21 = arith.constant dense<0xFF800000> : vector<4x8xf32>
    %58 = vector.multi_reduction <maximumf>, %57, %cst_21 [2] : vector<4x8x8xf32> to vector<4x8xf32>
    %59 = vector.shape_cast %58 : vector<4x8xf32> to vector<4x8x1xf32>
    %60 = vector.broadcast %59 : vector<4x8x1xf32> to vector<4x8x8xf32>
    %61 = arith.subf %57, %60 : vector<4x8x8xf32>
    %62 = math.exp %61 : vector<4x8x8xf32>
    %cst_22 = arith.constant dense<0.000000e+00> : vector<4x8xf32>
    %63 = vector.multi_reduction <add>, %62, %cst_22 [2] : vector<4x8x8xf32> to vector<4x8xf32>
    %64 = vector.shape_cast %63 : vector<4x8xf32> to vector<4x8x1xf32>
    %65 = tpu.reciprocal %64 {approx = true} : vector<4x8x1xf32> -> vector<4x8x1xf32>
    %66 = vector.broadcast %65 : vector<4x8x1xf32> to vector<4x8x8xf32>
    %67 = arith.mulf %62, %66 : vector<4x8x8xf32>
    %68 = arith.truncf %67 : vector<4x8x8xf32> to vector<4x8x8xbf16>
    %c0_23 = arith.constant 0 : index
    %c0_24 = arith.constant 0 : index
    %c0_25 = arith.constant 0 : index
    %c0_26 = arith.constant 0 : index
    %69 = vector.load %arg12[%c0_23, %c0_24, %c0_25, %c0_26] : memref<1x4x8x8xbf16, #tpu.memory_space<vmem>>, vector<1x4x8x8xbf16>
    %70 = vector.shape_cast %69 : vector<1x4x8x8xbf16> to vector<4x8x8xbf16>
    %71 = vector.shape_cast %68 : vector<4x8x8xbf16> to vector<1x4x8x8xbf16>
    tpu.vector_store %arg12[%c0_23, %c0_24, %c0_25, %c0_26], %71 {strides = array<i32>} : memref<1x4x8x8xbf16, #tpu.memory_space<vmem>>, vector<1x4x8x8xbf16>,
    "tpu.trace_start"() <{level = 10 : i32, message = "nqk,nkd->nqd"}> : () -> ()
    %cst_27 = arith.constant dense<0.000000e+00> : vector<4x8x8xf32>
    %72 = tpu.matmul %68, %47, %cst_27 {dimension_numbers = #tpu.dot_dimension_numbers<[2], [1], [1], [2], [0, 0, 0, 1, 1, 2], [0], [0]>} : vector<4x8x8xbf16>, vector<4x8x8xbf16>, vector<4x8x8xf32> -> vector<4x8x8xf32>
    "tpu.trace_stop"() : () -> ()
    %73 = arith.truncf %72 : vector<4x8x8xf32> to vector<4x8x8xbf16>
    %74 = tpu.transpose %73, [1, 0, 2] : vector<4x8x8xbf16> -> vector<8x4x8xbf16>
    %75 = vector.shape_cast %74 : vector<8x4x8xbf16> to vector<8x32xbf16>
    %c0_28 = arith.constant 0 : index
    %c0_29 = arith.constant 0 : index
    %76 = vector.load %arg8[%c0_28, %c0_29] : memref<32x32xbf16, #tpu.memory_space<vmem>>, vector<32x32xbf16>
    %cst_30 = arith.constant dense<0.000000e+00> : vector<8x32xf32>
    %77 = tpu.matmul %75, %76, %cst_30 {dimension_numbers = #tpu.dot_dimension_numbers<[1], [0], [0], [1], [0, 0, 1, 1], [], []>} : vector<8x32xbf16>, vector<32x32xbf16>, vector<8x32xf32> -> vector<8x32xf32>
    %78 = vector.broadcast %6 : vector<1x32xf32> to vector<8x32xf32>
    %79 = arith.addf %77, %78 : vector<8x32xf32>
    %80 = arith.addf %12, %79 : vector<8x32xf32>
    %cst_31 = arith.constant dense<0.000000e+00> : vector<8xf32>
    %81 = vector.multi_reduction <add>, %80, %cst_31 [1] : vector<8x32xf32> to vector<8xf32>
    %82 = vector.shape_cast %81 : vector<8xf32> to vector<8x1xf32>
    %cst_32 = arith.constant 3.200000e+01 : f32
    %83 = vector.broadcast %cst_32 : f32 to vector<8x1xf32>
    %84 = arith.divf %82, %83 : vector<8x1xf32>
    %85 = vector.broadcast %84 : vector<8x1xf32> to vector<8x32xf32>
    %86 = arith.subf %80, %85 : vector<8x32xf32>
    %87 = arith.mulf %86, %86 : vector<8x32xf32>
    %cst_33 = arith.constant dense<0.000000e+00> : vector<8xf32>
    %88 = vector.multi_reduction <add>, %87, %cst_33 [1] : vector<8x32xf32> to vector<8xf32>
    %89 = vector.shape_cast %88 : vector<8xf32> to vector<8x1xf32>
    %cst_34 = arith.constant 3.200000e+01 : f32
    %90 = vector.broadcast %cst_34 : f32 to vector<8x1xf32>
    %91 = arith.divf %89, %90 : vector<8x1xf32>
    %cst_35 = arith.constant 9.99999997E-7 : f32
    %92 = vector.broadcast %cst_35 : f32 to vector<8x1xf32>
    %93 = arith.addf %91, %92 : vector<8x1xf32>
    %94 = math.rsqrt %93 : vector<8x1xf32>
    %95 = vector.broadcast %94 : vector<8x1xf32> to vector<8x32xf32>
    %96 = arith.mulf %86, %95 : vector<8x32xf32>
    %97 = vector.broadcast %7 : vector<1x32xf32> to vector<8x32xf32>
    %98 = arith.mulf %96, %97 : vector<8x32xf32>
    %99 = vector.broadcast %8 : vector<1x32xf32> to vector<8x32xf32>
    %100 = arith.addf %98, %99 : vector<8x32xf32>
    %101 = arith.truncf %100 : vector<8x32xf32> to vector<8x32xbf16>
    %c0_36 = arith.constant 0 : index
    %c0_37 = arith.constant 0 : index
    %102 = vector.load %arg9[%c0_36, %c0_37] : memref<32x128xbf16, #tpu.memory_space<vmem>>, vector<32x128xbf16>
    %cst_38 = arith.constant dense<0.000000e+00> : vector<8x128xf32>
    %103 = tpu.matmul %101, %102, %cst_38 {dimension_numbers = #tpu.dot_dimension_numbers<[1], [0], [0], [1], [0, 0, 1, 1], [], []>} : vector<8x32xbf16>, vector<32x128xbf16>, vector<8x128xf32> -> vector<8x128xf32>
    %104 = vector.broadcast %10 : vector<1x128xf32> to vector<8x128xf32>
    %105 = arith.addf %103, %104 : vector<8x128xf32>
    %cst_39 = arith.constant 5.000000e-01 : f32
    %106 = vector.broadcast %cst_39 : f32 to vector<8x128xf32>
    %107 = arith.mulf %106, %105 : vector<8x128xf32>
    %cst_40 = arith.constant 4.471500e-02 : f32
    %108 = vector.broadcast %cst_40 : f32 to vector<8x128xf32>
    %109 = arith.mulf %108, %105 : vector<8x128xf32>
    %110 = arith.mulf %109, %105 : vector<8x128xf32>
    %111 = arith.mulf %110, %105 : vector<8x128xf32>
    %112 = arith.addf %105, %111 : vector<8x128xf32>
    %cst_41 = arith.constant 0.797884583 : f32
    %113 = vector.broadcast %cst_41 : f32 to vector<8x128xf32>
    %114 = arith.mulf %113, %112 : vector<8x128xf32>
    %115 = math.tanh %114 : vector<8x128xf32>
    %cst_42 = arith.constant 1.000000e+00 : f32
    %116 = vector.broadcast %cst_42 : f32 to vector<8x128xf32>
    %117 = arith.addf %116, %115 : vector<8x128xf32>
    %118 = arith.mulf %107, %117 : vector<8x128xf32>
    %119 = arith.truncf %118 : vector<8x128xf32> to vector<8x128xbf16>
    %c0_43 = arith.constant 0 : index
    %c0_44 = arith.constant 0 : index
    %120 = vector.load %arg10[%c0_43, %c0_44] : memref<128x32xbf16, #tpu.memory_space<vmem>>, vector<128x32xbf16>
    %cst_45 = arith.constant dense<0.000000e+00> : vector<8x32xf32>
    %121 = tpu.matmul %119, %120, %cst_45 {dimension_numbers = #tpu.dot_dimension_numbers<[1], [0], [0], [1], [0, 0, 1, 1], [], []>} : vector<8x128xbf16>, vector<128x32xbf16>, vector<8x32xf32> -> vector<8x32xf32>
    %122 = vector.broadcast %9 : vector<1x32xf32> to vector<8x32xf32>
    %123 = arith.addf %121, %122 : vector<8x32xf32>
    %124 = arith.addf %80, %123 : vector<8x32xf32>
    %c0_46 = arith.constant 0 : index
    %c0_47 = arith.constant 0 : index
    %c0_48 = arith.constant 0 : index
    %125 = vector.load %arg11[%c0_46, %c0_47, %c0_48] : memref<1x8x32xf32, #tpu.memory_space<vmem>>, vector<1x8x32xf32>
    %126 = vector.shape_cast %125 : vector<1x8x32xf32> to vector<8x32xf32>
    %127 = vector.shape_cast %124 : vector<8x32xf32> to vector<1x8x32xf32>
    tpu.vector_store %arg11[%c0_46, %c0_47, %c0_48], %127 {strides = array<i32>} : memref<1x8x32xf32, #tpu.memory_space<vmem>>, vector<1x8x32xf32>,
    return
  }
  func.func @transform_0(%arg0: i32, %arg1: i32) -> (i32, i32, i32) {
    %c0_i32 = arith.constant 0 : i32
    %c0_i32_0 = arith.constant 0 : i32
    %c0_i32_1 = arith.constant 0 : i32
    return %arg0, %c0_i32, %c0_i32_0 : i32, i32, i32
  }
  func.func @transform_1(%arg0: i32, %arg1: i32) -> (i32, i32) {
    %c0_i32 = arith.constant 0 : i32
    %c0_i32_0 = arith.constant 0 : i32
    %c0_i32_1 = arith.constant 0 : i32
    return %c0_i32, %c0_i32_0 : i32, i32
  }
  func.func @transform_2(%arg0: i32, %arg1: i32) -> (i32, i32) {
    %c0_i32 = arith.constant 0 : i32
    %c0_i32_0 = arith.constant 0 : i32
    %c0_i32_1 = arith.constant 0 : i32
    return %c0_i32, %c0_i32_0 : i32, i32
  }
  func.func @transform_3(%arg0: i32, %arg1: i32) -> (i32, i32) {
    %c0_i32 = arith.constant 0 : i32
    %c0_i32_0 = arith.constant 0 : i32
    %c0_i32_1 = arith.constant 0 : i32
    return %c0_i32, %c0_i32_0 : i32, i32
  }
  func.func @transform_4(%arg0: i32, %arg1: i32) -> (i32, i32) {
    %c0_i32 = arith.constant 0 : i32
    %c0_i32_0 = arith.constant 0 : i32
    %c0_i32_1 = arith.constant 0 : i32
    return %c0_i32, %c0_i32_0 : i32, i32
  }
  func.func @transform_5(%arg0: i32, %arg1: i32) -> (i32, i32) {
    %c0_i32 = arith.constant 0 : i32
    %c0_i32_0 = arith.constant 0 : i32
    %c0_i32_1 = arith.constant 0 : i32
    return %c0_i32, %c0_i32_0 : i32, i32
  }
  func.func @transform_6(%arg0: i32, %arg1: i32) -> (i32, i32) {
    %c0_i32 = arith.constant 0 : i32
    %c0_i32_0 = arith.constant 0 : i32
    %c0_i32_1 = arith.constant 0 : i32
    return %c0_i32, %c0_i32_0 : i32, i32
  }
  func.func @transform_7(%arg0: i32, %arg1: i32) -> (i32, i32) {
    %c0_i32 = arith.constant 0 : i32
    %c0_i32_0 = arith.constant 0 : i32
    %c0_i32_1 = arith.constant 0 : i32
    return %c0_i32, %c0_i32_0 : i32, i32
  }
  func.func @transform_8(%arg0: i32, %arg1: i32) -> (i32, i32) {
    %c0_i32 = arith.constant 0 : i32
    %c0_i32_0 = arith.constant 0 : i32
    %c0_i32_1 = arith.constant 0 : i32
    return %c0_i32, %c0_i32_0 : i32, i32
  }
  func.func @transform_9(%arg0: i32, %arg1: i32) -> (i32, i32, i32) {
    %c0_i32 = arith.constant 0 : i32
    %c0_i32_0 = arith.constant 0 : i32
    return %arg0, %arg1, %c0_i32 : i32, i32, i32
  }
  func.func @transform_10(%arg0: i32, %arg1: i32) -> (i32, i32, i32, i32) {
    %c0_i32 = arith.constant 0 : i32
    %c0_i32_0 = arith.constant 0 : i32
    %c0_i32_1 = arith.constant 0 : i32
    return %arg0, %c0_i32, %arg1, %c0_i32_0 : i32, i32, i32, i32
  }
}

</mosaic_0001>

<llo_original>
// kernel: tpu_custom_call.1
$region0: #{tpu_custom_call.1}
  #allocation0 [shape = 'u32[]', space=smem, size = 0x4, offset = 0x4, fixed_abs, tag = 'smem constant byte address 0x4 - core index']
  #allocation1 [shape = 'u32[72,128]{1,0:T(1,128)}', space=vmem, size = 0x9000, scoped, tag = 'internal scratch']
  %s0 = inlined_call_operand.vmem [shape: f32[2,8,32], index: 0, kind: input, shape index: {}]
  %s1 = inlined_call_operand.vmem [shape: f32[9,32], index: 1, kind: input, shape index: {}]
  %s2 = inlined_call_operand.vmem [shape: f32[1,128], index: 2, kind: input, shape index: {}]
  %s3 = inlined_call_operand.vmem [shape: bf16[32,32], index: 3, kind: input, shape index: {}]
  %s4 = inlined_call_operand.vmem [shape: bf16[32,32], index: 4, kind: input, shape index: {}]
  %s5 = inlined_call_operand.vmem [shape: bf16[32,32], index: 5, kind: input, shape index: {}]
  %s6 = inlined_call_operand.hbm [shape: bf16[32,32], index: 6, kind: input, shape index: {}]
  %s7 = inlined_call_operand.hbm [shape: bf16[32,128], index: 7, kind: input, shape index: {}]
  %s8 = inlined_call_operand.vmem [shape: bf16[128,32], index: 8, kind: input, shape index: {}]
  %s9 = inlined_call_operand.hbm [shape: f32[2,8,32], index: 9, kind: output, shape index: {0}]
  %s10 = inlined_call_operand.hbm [shape: bf16[2,4,8,8], index: 10, kind: output, shape index: {1}]
  %11 = xla_tuple %s9, %s10
  %s12 = sld [smem:[#allocation0]]
  $region85: #{tpu_custom_call.1} parent=0
    _
  %s14 = ssub.s32 1, %s12
  %s15 = scalar_select 0, %s14, %s12
  $region1: #{tpu_custom_call.1} parent=0
    #allocation2 [shape = 'u8[8192]{0}', space=vmem, size = 0x2000, scoped, tag = 'input window, operand 6, single buffered']
    #allocation3 [shape = 's32[2]{0}', space=sflag, size = 0x8, scoped, tag = 'scoped memory for tpu_custom_call.1']
    #allocation4 [shape = 's32[2]{0}', space=sflag, size = 0x8, scoped, tag = 'scoped memory for tpu_custom_call.1']
    #allocation5 [shape = 'u8[8192]{0}', space=vmem, size = 0x2000, scoped, tag = 'input window, operand 7, single buffered']
    #allocation6 [shape = 's32[1]{0}', space=sflag, size = 0x4, scoped, tag = 'scoped memory for tpu_custom_call.1']
    #allocation7 [shape = 'u8[8192]{0}', space=vmem, size = 0x2000, scoped, tag = 'output window, operand 0']
    #allocation8 [shape = 'u8[16384]{0}', space=vmem, size = 0x4000, scoped, tag = 'output window, operand 1']
    #allocation9 [shape = 's32[2]{0}', space=sflag, size = 0x8, scoped, tag = 'scoped memory for tpu_custom_call.1']
    %16 = vsyncpa [#allocation3], 0
    %17 = vsyncpa [#allocation6], 0
    %18 = vsyncpa [#allocation4], 0
    %s19 = scalar_lea.sflag [#allocation4], 1
    %20 = vsyncpa %s19, 0
    %21 = vsyncpa [#allocation9], 0
    %s22 = scalar_lea.sflag [#allocation9], 1
    %23 = vsyncpa %s22, 0
    loop: start=0, step=1, limit=4
    $region2: #{tpu_custom_call.1} parent=1 // loop_pre_header
      _
    $region3: #{tpu_custom_call.1} parent=1 // loop_header
      %s25 = sphi 0, %s29
      %p26 = scmp.ge.s32.totalorder %s25, 4
      %s32 = sphi 0, %s44
      %s33 = sphi 0, %s40
      %s34 = sphi 0, %s32
      %s35 = sphi 0, %s33
      %s36 = sphi 0, %s34
      %s37 = sphi 0, %s35
      %s47 = sphi 0, %s49
      %s50 = sphi 0, %s47
      %s51 = sphi 0, %s50
      %s67 = sphi 0, %s51
      %s71 = sphi 0, %s71
      %s73 = sphi 0, %s71
      %s74 = sphi 0, %s73
      %s88 = sphi 0, %s74
      %s92 = sphi 0, %s92
      %s94 = sphi 0, %s92
      %s95 = sphi 0, %s94
      %s109 = sphi 0, %s95
      %s113 = sphi 0, %s113
      %s115 = sphi 0, %s113
      %s116 = sphi 0, %s115
      %s130 = sphi 0, %s116
      %s134 = sphi 0, %s134
      %s136 = sphi 0, %s134
      %s137 = sphi 0, %s136
      %s151 = sphi 0, %s137
      %s155 = sphi 0, %s155
      %s157 = sphi 0, %s155
      %s158 = sphi 0, %s157
      %s172 = sphi 0, %s158
      %s176 = sphi 0, %s176
      %s178 = sphi 0, %s176
      %s179 = sphi 0, %s178
      %s193 = sphi 0, %s179
      %s197 = sphi 0, %s197
      %s199 = sphi 0, %s197
      %s200 = sphi 0, %s199
      %s214 = sphi 0, %s200
      %s218 = sphi 0, %s218
      %s220 = sphi 0, %s218
      %s221 = sphi 0, %s220
      %s235 = sphi 0, %s221
      %s243 = sphi 0, %s245
      %s246 = sphi 0, %s243
      %s247 = sphi 0, %s246
      %s263 = sphi 0, %s247
      %s271 = sphi 0, %s273
      %s274 = sphi 0, %s271
      %s275 = sphi 0, %s274
      %s291 = sphi 0, %s275
    $region4: #{tpu_custom_call.1} parent=1 // loop_header_branch
      %28 = sbr.rel (%p26) target = $region8
    $region5: #{tpu_custom_call.1} parent=1 // loop_body
      %s30 = ssub.s32 %s25, 1
      %s31 = ssub.s32 %s25, 2
      %s38 = sadd.s32 1, %s33
      %p39 = scmp.ge.s32.totalorder %s38, 1
      %s40 = scalar_select %p39, 0, %s38
      %s41 = sadd.s32 1, %s32
      %s42 = scalar_select %p39, %s41, %s32
      %p43 = scmp.ge.s32.totalorder %s42, 2
      %s44 = scalar_select %p43, 0, %s42
      %s45 = ssub.s32 %s32, %s44
      %p46 = scmp.eq.s32.totalorder %s45, 0
      %s48 = sadd.s32 %s47, 1
      %s49 = scalar_select %p46, %s47, %s48
      %p52 = pneg %p46
      %p53 = scmp.eq.s32.totalorder %s25, 1
      %p54 = por %p52, %p53
      %p55 = scmp.ne.s32.totalorder %s47, %s50
      %p56 = scmp.eq.s32.totalorder %s25, 0
      %p57 = por %p55, %p56
      %p58 = scmp.ne.s32.totalorder %s47, %s50
      %p59 = scmp.eq.s32.totalorder %s30, 1
      %p60 = por %p58, %p59
      %p61 = scmp.ne.s32.totalorder %s50, %s51
      %p62 = scmp.eq.s32.totalorder %s30, 0
      %p63 = por %p61, %p62
      %p64 = scmp.ne.s32.totalorder %s50, %s51
      %p65 = scmp.eq.s32.totalorder %s31, 1
      %p66 = por %p64, %p65
      %p68 = scmp.ne.s32.totalorder %s51, %s67
      %p69 = scmp.eq.s32.totalorder %s31, 0
      %p70 = por %p68, %p69
      %s72 = sadd.s32 %s71, 1
      %p75 = scmp.eq.s32.totalorder %s25, 1
      %p76 = scmp.ne.s32.totalorder %s71, %s73
      %p77 = scmp.eq.s32.totalorder %s25, 0
      %p78 = por %p76, %p77
      %p79 = scmp.ne.s32.totalorder %s71, %s73
      %p80 = scmp.eq.s32.totalorder %s30, 1
      %p81 = por %p79, %p80
      %p82 = scmp.ne.s32.totalorder %s73, %s74
      %p83 = scmp.eq.s32.totalorder %s30, 0
      %p84 = por %p82, %p83
      %p85 = scmp.ne.s32.totalorder %s73, %s74
      %p86 = scmp.eq.s32.totalorder %s31, 1
      %p87 = por %p85, %p86
      %p89 = scmp.ne.s32.totalorder %s74, %s88
      %p90 = scmp.eq.s32.totalorder %s31, 0
      %p91 = por %p89, %p90
      %s93 = sadd.s32 %s92, 1
      %p96 = scmp.eq.s32.totalorder %s25, 1
      %p97 = scmp.ne.s32.totalorder %s92, %s94
      %p98 = scmp.eq.s32.totalorder %s25, 0
      %p99 = por %p97, %p98
      %p100 = scmp.ne.s32.totalorder %s92, %s94
      %p101 = scmp.eq.s32.totalorder %s30, 1
      %p102 = por %p100, %p101
      %p103 = scmp.ne.s32.totalorder %s94, %s95
      %p104 = scmp.eq.s32.totalorder %s30, 0
      %p105 = por %p103, %p104
      %p106 = scmp.ne.s32.totalorder %s94, %s95
      %p107 = scmp.eq.s32.totalorder %s31, 1
      %p108 = por %p106, %p107
      %p110 = scmp.ne.s32.totalorder %s95, %s109
      %p111 = scmp.eq.s32.totalorder %s31, 0
      %p112 = por %p110, %p111
      %s114 = sadd.s32 %s113, 1
      %p117 = scmp.eq.s32.totalorder %s25, 1
      %p118 = scmp.ne.s32.totalorder %s113, %s115
      %p119 = scmp.eq.s32.totalorder %s25, 0
      %p120 = por %p118, %p119
      %p121 = scmp.ne.s32.totalorder %s113, %s115
      %p122 = scmp.eq.s32.totalorder %s30, 1
      %p123 = por %p121, %p122
      %p124 = scmp.ne.s32.totalorder %s115, %s116
      %p125 = scmp.eq.s32.totalorder %s30, 0
      %p126 = por %p124, %p125
      %p127 = scmp.ne.s32.totalorder %s115, %s116
      %p128 = scmp.eq.s32.totalorder %s31, 1
      %p129 = por %p127, %p128
      %p131 = scmp.ne.s32.totalorder %s116, %s130
      %p132 = scmp.eq.s32.totalorder %s31, 0
      %p133 = por %p131, %p132
      %s135 = sadd.s32 %s134, 1
      %p138 = scmp.eq.s32.totalorder %s25, 1
      %p139 = scmp.ne.s32.totalorder %s134, %s136
      %p140 = scmp.eq.s32.totalorder %s25, 0
      %p141 = por %p139, %p140
      %p142 = scmp.ne.s32.totalorder %s134, %s136
      %p143 = scmp.eq.s32.totalorder %s30, 1
      %p144 = por %p142, %p143
      %p145 = scmp.ne.s32.totalorder %s136, %s137
      %p146 = scmp.eq.s32.totalorder %s30, 0
      %p147 = por %p145, %p146
      %p148 = scmp.ne.s32.totalorder %s136, %s137
      %p149 = scmp.eq.s32.totalorder %s31, 1
      %p150 = por %p148, %p149
      %p152 = scmp.ne.s32.totalorder %s137, %s151
      %p153 = scmp.eq.s32.totalorder %s31, 0
      %p154 = por %p152, %p153
      %s156 = sadd.s32 %s155, 1
      %p159 = scmp.eq.s32.totalorder %s25, 1
      %p160 = scmp.ne.s32.totalorder %s155, %s157
      %p161 = scmp.eq.s32.totalorder %s25, 0
      %p162 = por %p160, %p161
      %p163 = scmp.ne.s32.totalorder %s155, %s157
      %p164 = scmp.eq.s32.totalorder %s30, 1
      %p165 = por %p163, %p164
      %p166 = scmp.ne.s32.totalorder %s157, %s158
      %p167 = scmp.eq.s32.totalorder %s30, 0
      %p168 = por %p166, %p167
      %p169 = scmp.ne.s32.totalorder %s157, %s158
      %p170 = scmp.eq.s32.totalorder %s31, 1
      %p171 = por %p169, %p170
      %p173 = scmp.ne.s32.totalorder %s158, %s172
      %p174 = scmp.eq.s32.totalorder %s31, 0
      %p175 = por %p173, %p174
      %s177 = sadd.s32 %s176, 1
      %p180 = scmp.eq.s32.totalorder %s25, 1
      %p181 = scmp.ne.s32.totalorder %s176, %s178
      %p182 = scmp.eq.s32.totalorder %s25, 0
      %p183 = por %p181, %p182
      %p184 = scmp.ne.s32.totalorder %s176, %s178
      %p185 = scmp.eq.s32.totalorder %s30, 1
      %p186 = por %p184, %p185
      %p187 = scmp.ne.s32.totalorder %s178, %s179
      %p188 = scmp.eq.s32.totalorder %s30, 0
      %p189 = por %p187, %p188
      %p190 = scmp.ne.s32.totalorder %s178, %s179
      %p191 = scmp.eq.s32.totalorder %s31, 1
      %p192 = por %p190, %p191
      %p194 = scmp.ne.s32.totalorder %s179, %s193
      %p195 = scmp.eq.s32.totalorder %s31, 0
      %p196 = por %p194, %p195
      %s198 = sadd.s32 %s197, 1
      %p201 = scmp.eq.s32.totalorder %s25, 1
      %p202 = scmp.ne.s32.totalorder %s197, %s199
      %p203 = scmp.eq.s32.totalorder %s25, 0
      %p204 = por %p202, %p203
      %p205 = scmp.ne.s32.totalorder %s197, %s199
      %p206 = scmp.eq.s32.totalorder %s30, 1
      %p207 = por %p205, %p206
      %p208 = scmp.ne.s32.totalorder %s199, %s200
      %p209 = scmp.eq.s32.totalorder %s30, 0
      %p210 = por %p208, %p209
      %p211 = scmp.ne.s32.totalorder %s199, %s200
      %p212 = scmp.eq.s32.totalorder %s31, 1
      %p213 = por %p211, %p212
      %p215 = scmp.ne.s32.totalorder %s200, %s214
      %p216 = scmp.eq.s32.totalorder %s31, 0
      %p217 = por %p215, %p216
      %s219 = sadd.s32 %s218, 1
      %p222 = scmp.eq.s32.totalorder %s25, 1
      %p223 = scmp.ne.s32.totalorder %s218, %s220
      %p224 = scmp.eq.s32.totalorder %s25, 0
      %p225 = por %p223, %p224
      %p226 = scmp.ne.s32.totalorder %s218, %s220
      %p227 = scmp.eq.s32.totalorder %s30, 1
      %p228 = por %p226, %p227
      %p229 = scmp.ne.s32.totalorder %s220, %s221
      %p230 = scmp.eq.s32.totalorder %s30, 0
      %p231 = por %p229, %p230
      %p232 = scmp.ne.s32.totalorder %s220, %s221
      %p233 = scmp.eq.s32.totalorder %s31, 1
      %p234 = por %p232, %p233
      %p236 = scmp.ne.s32.totalorder %s221, %s235
      %p237 = scmp.eq.s32.totalorder %s31, 0
      %p238 = por %p236, %p237
      %s239 = ssub.s32 %s32, %s44
      %s240 = ssub.s32 %s33, %s40
      %s241 = sor.u32 %s239, %s240
      %p242 = scmp.eq.s32.totalorder %s241, 0
      %s244 = sadd.s32 %s243, 1
      %s245 = scalar_select %p242, %s243, %s244
      %p248 = pneg %p242
      %p249 = scmp.eq.s32.totalorder %s25, 1
      %p250 = por %p248, %p249
      %p251 = scmp.ne.s32.totalorder %s243, %s246
      %p252 = scmp.eq.s32.totalorder %s25, 0
      %p253 = por %p251, %p252
      %p254 = scmp.ne.s32.totalorder %s243, %s246
      %p255 = scmp.eq.s32.totalorder %s30, 1
      %p256 = por %p254, %p255
      %p257 = scmp.ne.s32.totalorder %s246, %s247
      %p258 = scmp.eq.s32.totalorder %s30, 0
      %p259 = por %p257, %p258
      %p260 = scmp.ne.s32.totalorder %s246, %s247
      %p261 = scmp.eq.s32.totalorder %s31, 1
      %p262 = por %p260, %p261
      %p264 = scmp.ne.s32.totalorder %s247, %s263
      %p265 = scmp.eq.s32.totalorder %s31, 0
      %p266 = por %p264, %p265
      %s267 = ssub.s32 %s32, %s44
      %s268 = ssub.s32 %s33, %s40
      %s269 = sor.u32 %s267, %s268
      %p270 = scmp.eq.s32.totalorder %s269, 0
      %s272 = sadd.s32 %s271, 1
      %s273 = scalar_select %p270, %s271, %s272
      %p276 = pneg %p270
      %p277 = scmp.eq.s32.totalorder %s25, 1
      %p278 = por %p276, %p277
      %p279 = scmp.ne.s32.totalorder %s271, %s274
      %p280 = scmp.eq.s32.totalorder %s25, 0
      %p281 = por %p279, %p280
      %p282 = scmp.ne.s32.totalorder %s271, %s274
      %p283 = scmp.eq.s32.totalorder %s30, 1
      %p284 = por %p282, %p283
      %p285 = scmp.ne.s32.totalorder %s274, %s275
      %p286 = scmp.eq.s32.totalorder %s30, 0
      %p287 = por %p285, %p286
      %p288 = scmp.ne.s32.totalorder %s274, %s275
      %p289 = scmp.eq.s32.totalorder %s31, 1
      %p290 = por %p288, %p289
      %p292 = scmp.ne.s32.totalorder %s275, %s291
      %p293 = scmp.eq.s32.totalorder %s31, 0
      %p294 = por %p292, %p293
      %p295 = scmp.le.s32.totalorder 1, %s25
      %p296 = scmp.lt.s32.totalorder %s25, 3
      %p297 = pnand %p295, %p296
      %p298 = pneg %p297
      // Predicated region
      $region9: #{tpu_custom_call.1} parent=5 // pred_check
        _
      $region10: #{tpu_custom_call.1} parent=5 // pred_check_branch
        %300 = sbr.rel (%p297) target = $region12
      $region11: #{tpu_custom_call.1} parent=5 // pred_region
        %s301 = ssub.s32 %s25, 1
        // Predicated region
        $region13: #{tpu_custom_call.1} parent=11 // pred_check
          %p302 = pneg %p84
        $region14: #{tpu_custom_call.1} parent=11 // pred_check_branch
          %304 = sbr.rel (%p302) target = $region16
        $region15: #{tpu_custom_call.1} parent=11 // pred_region
          _
        $region16: #{tpu_custom_call.1} parent=11 // pred_fallthru
          _
        // Predicated region
        $region17: #{tpu_custom_call.1} parent=11 // pred_check
          %p305 = pneg %p105
        $region18: #{tpu_custom_call.1} parent=11 // pred_check_branch
          %307 = sbr.rel (%p305) target = $region20
        $region19: #{tpu_custom_call.1} parent=11 // pred_region
          _
        $region20: #{tpu_custom_call.1} parent=11 // pred_fallthru
          _
        // Predicated region
        $region21: #{tpu_custom_call.1} parent=11 // pred_check
          %p308 = pneg %p126
        $region22: #{tpu_custom_call.1} parent=11 // pred_check_branch
          %310 = sbr.rel (%p308) target = $region24
        $region23: #{tpu_custom_call.1} parent=11 // pred_region
          _
        $region24: #{tpu_custom_call.1} parent=11 // pred_fallthru
          _
        // Predicated region
        $region25: #{tpu_custom_call.1} parent=11 // pred_check
          %p311 = pneg %p147
        $region26: #{tpu_custom_call.1} parent=11 // pred_check_branch
          %313 = sbr.rel (%p311) target = $region28
        $region27: #{tpu_custom_call.1} parent=11 // pred_region
          _
        $region28: #{tpu_custom_call.1} parent=11 // pred_fallthru
          _
        // Predicated region
        $region29: #{tpu_custom_call.1} parent=11 // pred_check
          %p314 = pneg %p168
        $region30: #{tpu_custom_call.1} parent=11 // pred_check_branch
          %316 = sbr.rel (%p314) target = $region32
        $region31: #{tpu_custom_call.1} parent=11 // pred_region
          _
        $region32: #{tpu_custom_call.1} parent=11 // pred_fallthru
          _
        // Predicated region
        $region33: #{tpu_custom_call.1} parent=11 // pred_check
          %p317 = pneg %p189
        $region34: #{tpu_custom_call.1} parent=11 // pred_check_branch
          %319 = sbr.rel (%p317) target = $region36
        $region35: #{tpu_custom_call.1} parent=11 // pred_region
          %321 = vsyncadd [#allocation3], 0
          %s322 = sshll.u32 %s6, 4
          %s323 = int_to_ptr.hbm [resolvable:$true] %s322
          %s324 = sshll.u32 [#allocation2], 4
          %s325 = int_to_ptr.vmem [resolvable:$true] %s324
          %330 = dma.hbm_to_vmem [thread:$0]  %s323, 256, %s325, [#allocation3], 64, 64, 4
        $region36: #{tpu_custom_call.1} parent=11 // pred_fallthru
          _
        // Predicated region
        $region37: #{tpu_custom_call.1} parent=11 // pred_check
          %p331 = pneg %p210
        $region38: #{tpu_custom_call.1} parent=11 // pred_check_branch
          %333 = sbr.rel (%p331) target = $region40
        $region39: #{tpu_custom_call.1} parent=11 // pred_region
          %335 = vsyncadd [#allocation6], 0
          %s336 = sshll.u32 %s7, 4
          %s337 = int_to_ptr.hbm [resolvable:$true] %s336
          %s338 = sshll.u32 [#allocation5], 4
          %s339 = int_to_ptr.vmem [resolvable:$true] %s338
          %344 = dma.hbm_to_vmem [thread:$0]  %s337, 256, %s339, [#allocation6], 64, 64, 4
        $region40: #{tpu_custom_call.1} parent=11 // pred_fallthru
          _
        // Predicated region
        $region41: #{tpu_custom_call.1} parent=11 // pred_check
          %p345 = pneg %p231
        $region42: #{tpu_custom_call.1} parent=11 // pred_check_branch
          %347 = sbr.rel (%p345) target = $region44
        $region43: #{tpu_custom_call.1} parent=11 // pred_region
          _
        $region44: #{tpu_custom_call.1} parent=11 // pred_fallthru
          _
      $region12: #{tpu_custom_call.1} parent=5 // pred_fallthru
        _
      %p348 = scmp.lt.s32.totalorder %s25, 2
      // Predicated region
      $region45: #{tpu_custom_call.1} parent=5 // pred_check
        %p349 = pneg %p348
      $region46: #{tpu_custom_call.1} parent=5 // pred_check_branch
        %351 = sbr.rel (%p349) target = $region48
      $region47: #{tpu_custom_call.1} parent=5 // pred_region
        // Predicated region
        $region49: #{tpu_custom_call.1} parent=47 // pred_check
          %p352 = pneg %p57
        $region50: #{tpu_custom_call.1} parent=47 // pred_check_branch
          %354 = sbr.rel (%p352) target = $region52
        $region51: #{tpu_custom_call.1} parent=47 // pred_region
          %p355 = scmp.lt.s32.totalorder %s32, 1
          %s356 = scalar_select %p355, %s32, 1
          %s357 = smul.addr %s356, 8
          %s358 = scalar_lea.vmem %s0, %s357
        $region52: #{tpu_custom_call.1} parent=47 // pred_fallthru
          _
      $region48: #{tpu_custom_call.1} parent=5 // pred_fallthru
        _
      %p359 = scmp.le.s32.totalorder 1, %s25
      %p360 = scmp.lt.s32.totalorder %s25, 3
      %p361 = pnand %p359, %p360
      %p362 = pneg %p361
      // Predicated region
      $region53: #{tpu_custom_call.1} parent=5 // pred_check
        _
      $region54: #{tpu_custom_call.1} parent=5 // pred_check_branch
        %364 = sbr.rel (%p361) target = $region56
      $region55: #{tpu_custom_call.1} parent=5 // pred_region
        %s365 = ssub.s32 %s25, 1
        // Predicated region
        $region57: #{tpu_custom_call.1} parent=55 // pred_check
          %p366 = pneg %p189
        $region58: #{tpu_custom_call.1} parent=55 // pred_check_branch
          %368 = sbr.rel (%p366) target = $region60
        $region59: #{tpu_custom_call.1} parent=55 // pred_region
          %370 = dma.done [#allocation3], 256
        $region60: #{tpu_custom_call.1} parent=55 // pred_fallthru
          _
        // Predicated region
        $region61: #{tpu_custom_call.1} parent=55 // pred_check
          %p371 = pneg %p210
        $region62: #{tpu_custom_call.1} parent=55 // pred_check_branch
          %373 = sbr.rel (%p371) target = $region64
        $region63: #{tpu_custom_call.1} parent=55 // pred_region
          %375 = dma.done [#allocation6], 256
        $region64: #{tpu_custom_call.1} parent=55 // pred_fallthru
          _
        %p376 = scmp.lt.s32.totalorder %s34, 1
        %s377 = scalar_select %p376, %s34, 1
        %s378 = smul.addr %s377, 8
        %s379 = scalar_lea.vmem %s0, %s378
        %p380 = pneg %p63
        %p381 = pneg %p60
        %p382 = pneg %p84
        %p383 = pneg %p81
        %p384 = pneg %p105
        %p385 = pneg %p102
        %p386 = pneg %p126
        %p387 = pneg %p123
        %p388 = pneg %p147
        %p389 = pneg %p144
        %p390 = pneg %p168
        %p391 = pneg %p165
        %p392 = pneg %p189
        %p393 = pneg %p186
        %p394 = pneg %p210
        %p395 = pneg %p207
        %p396 = pneg %p231
        %p397 = pneg %p228
        %p398 = pneg %p259
        %p399 = pneg %p256
        %s400 = sand.u32 %s246, 1
        %s401 = scalar_lea.sflag [#allocation4], %s400
        %s402 = sand.u32 %s246, 1
        %s403 = smul.addr %s402, 8
        %s404 = scalar_lea.vmem [#allocation7], %s403
        %p405 = pneg %p287
        %p406 = pneg %p284
        %s407 = sand.u32 %s274, 1
        %s408 = scalar_lea.sflag [#allocation9], %s407
        %s409 = sand.u32 %s274, 1
        %s410 = smul.addr %s409, 16
        %s411 = scalar_lea.vmem [#allocation8], %s410
        %p412 = scmp.lt.s32.totalorder %s34, 1
        %s413 = scalar_select %p412, %s34, 1
        %s414 = smul.addr %s413, 8
        %s415 = scalar_lea.vmem %s0, %s414
        %v417 = vld [vmem:[%s1] sm:$0xff]
        %v418 = vld [vmem:[%s1 + $0x8] sm:$0x1]
        %v419 = vld [vmem:[%s2] sm:$0x1]
        %v420 = vld [vmem:[%s415] sm:$0xff]
        %vm421 = vcmask 261120
        %v422 = vsel %vm421, %v420, 0.0
        %423 = vadd.xlane.f32.xlu0 %v422
        %v424 = vpop.xlane.xlu0 %423
        %v425 = vrcp.pop 32.0
        %v426 = vmul.f32 32.0, %v425
        %v427 = vsub.f32 1.0, %v426
        %v428 = vmul.f32 %v425, %v427
        %v429 = vadd.f32 %v425, %v428
        %vm430 = vweird.f32 %v425
        %v431 = vsel %vm430, %v425, %v429
        %v432 = vmul.f32 %v424, %v431
        %v433 = vsub.f32 %v420, %v432
        %v434 = vmul.f32 %v433, %v433
        %v435 = vsel %vm421, %v434, 0.0
        %436 = vadd.xlane.f32.xlu0 %v435
        %v437 = vpop.xlane.xlu0 %436
        %v438 = vmul.f32 %v437, %v431
        %v439 = vadd.f32 %v438, 1e-06
        %v440 = vrsqrt.pop %v439
        %v441 = vmul.f32 %v440, %v439
        %v442 = vmul.f32 %v441, %v440
        %v443 = vmul.f32 0.5, %v442
        %v444 = vsub.f32 1.5, %v443
        %v445 = vmul.f32 %v440, %v444
        %vm446 = vweird.f32 %v439
        %vm447 = vweird.f32 %v440
        %vm448 = vmor %vm446, %vm447
        %v449 = vsel %vm448, %v440, %v445
        %v450 = vmul.f32 %v433, %v449
        %v451 = vperm.slane %v417, 0
        %v452 = vmul.f32 %v450, %v451
        %v453 = vperm.slane %v417, 1
        %v454 = vadd.f32 %v452, %v453
        %v455 = vpack.c.bf16 %v454, %v454
        %v456 = vld [vmem:[%s4] sm:$0xf]
        %v457 = vld [vmem:[%s4 + $0x4] sm:$0xf]
        %v458 = vld [vmem:[%s4 + $0x8] sm:$0xf]
        %v459 = vld [vmem:[%s4 + $0xc] sm:$0xf]
        %v460 = vperm.slane %v417, 3
        %v465 = vunpack.c.l.b16 %v456
        %v466 = vunpack.c.l.b16 %v457
        %v467 = vunpack.c.l.b16 %v458
        %v468 = vunpack.c.l.b16 %v459
        %v469 = vpack.c.b16 %v466, %v465
        %v470 = vpack.c.b16 %v468, %v467
        %v474 = vsel %vm421, %v455, 0
        %476 = vmatpush.bf16.msra.mxu0 0
        %477 = vmatpush.bf16.msra.mxu0 0
        %478 = vmatpush.bf16.msra.mxu0 0
        %479 = vmatpush.bf16.msra.mxu0 0
        %480 = vmatpush.bf16.msra.mxu0 0
        %481 = vmatpush.bf16.msra.mxu0 0
        %482 = vmatpush.bf16.msra.mxu0 %v470
        %483 = vmatpush.bf16.msra.mxu0 %v469
        %484 = vmatmul.bf16.gmra.mxu0 %v474
        %v485 = vpop.f32.mrf.mxu0
        %v486 = vadd.f32 %v460, %v485
        %v487 = vpop.f32.mrf.mxu0
        %488 = vdwg.mxu0
        %v489 = vld [vmem:[%s5] sm:$0xf]
        %v490 = vld [vmem:[%s5 + $0x4] sm:$0xf]
        %v491 = vld [vmem:[%s5 + $0x8] sm:$0xf]
        %v492 = vld [vmem:[%s5 + $0xc] sm:$0xf]
        %v493 = vperm.slane %v417, 4
        %v498 = vunpack.c.l.b16 %v489
        %v499 = vunpack.c.l.b16 %v490
        %v500 = vunpack.c.l.b16 %v491
        %v501 = vunpack.c.l.b16 %v492
        %v502 = vpack.c.b16 %v499, %v498
        %v503 = vpack.c.b16 %v501, %v500
        %506 = vmatpush.bf16.msra.mxu0 0
        %507 = vmatpush.bf16.msra.mxu0 0
        %508 = vmatpush.bf16.msra.mxu0 0
        %509 = vmatpush.bf16.msra.mxu0 0
        %510 = vmatpush.bf16.msra.mxu0 0
        %511 = vmatpush.bf16.msra.mxu0 0
        %512 = vmatpush.bf16.msra.mxu0 %v503
        %513 = vmatpush.bf16.msra.mxu0 %v502
        %514 = vmatmul.bf16.gmra.mxu0 %v474
        %v515 = vpop.f32.mrf.mxu0
        %v516 = vadd.f32 %v493, %v515
        %v517 = vpop.f32.mrf.mxu0
        %518 = vdwg.mxu0
        %v519 = vpack.c.bf16 %v486, %v486
        %521 = vrot.lane.b32.xlu0 %v519, 120
        %v522 = vpop.permute.xlu0 %521
        %523 = vrot.lane.b32.xlu0 %v519, 112
        %v524 = vpop.permute.xlu0 %523
        %525 = vrot.lane.b32.xlu0 %v519, 104
        %v526 = vpop.permute.xlu0 %525
        %v529 = vpack.i.b16 %v522, %v519
        %v530 = vshrl.u32 %v519, 16
        %v531 = vshrl.u32 %v522, 16
        %v532 = vpack.i.b16 %v531, %v530
        %v535 = vpack.i.b16 %v526, %v524
        %v536 = vshrl.u32 %v524, 16
        %v537 = vshrl.u32 %v526, 16
        %v538 = vpack.i.b16 %v537, %v536
        %v541 = vunpack.c.l.s4 1983009808
        %v542 = vunpack.c.0.s8 %v541
        %v543 = vperm.slane %v529, %v542
        %v546 = vunpack.c.l.s4 1983009808
        %v547 = vunpack.c.0.s8 %v546
        %v548 = vperm.slane %v535, %v547
        %v549 = vrot.slane %v548, 4
        %vm550 = vcmask 1047556
        %v551 = vsel %vm550, %v549, %v543
        %v552 = vrot.slane %v543, 4
        %v553 = vsel %vm550, %v548, %v552
        %v555 = vunpack.c.l.s4 1934713408
        %v556 = vunpack.c.0.s8 %v555
        %v557 = vperm.slane %v551, %v556
        %v559 = vunpack.c.l.s4 1934713408
        %v560 = vunpack.c.0.s8 %v559
        %v561 = vperm.slane %v553, %v560
        %v562 = vrot.slane %v557, 4
        %v563 = vsel %vm550, 0, %v562
        %v564 = vrot.slane %v561, 4
        %v565 = vsel %vm550, 0, %v564
        %v568 = vunpack.c.l.s4 1983009808
        %v569 = vunpack.c.0.s8 %v568
        %v570 = vperm.slane %v532, %v569
        %v573 = vunpack.c.l.s4 1983009808
        %v574 = vunpack.c.0.s8 %v573
        %v575 = vperm.slane %v538, %v574
        %v576 = vrot.slane %v575, 4
        %v577 = vsel %vm550, %v576, %v570
        %v578 = vrot.slane %v570, 4
        %v579 = vsel %vm550, %v575, %v578
        %v581 = vunpack.c.l.s4 1934713408
        %v582 = vunpack.c.0.s8 %v581
        %v583 = vperm.slane %v577, %v582
        %v585 = vunpack.c.l.s4 1934713408
        %v586 = vunpack.c.0.s8 %v585
        %v587 = vperm.slane %v579, %v586
        %v588 = vrot.slane %v583, 4
        %v589 = vsel %vm550, 0, %v588
        %v590 = vrot.slane %v587, 4
        %v591 = vsel %vm550, 0, %v590
        %v592 = vsel %vm550, %v564, %v557
        %v594 = vunpack.c.l.s4 1983009808
        %v595 = vunpack.c.0.s8 %v594
        %v596 = vperm.slane %v592, %v595
        %v597 = vrot.slane %v565, 4
        %v598 = vsel %vm550, %v597, %v563
        %v600 = vunpack.c.l.s4 1983009808
        %v601 = vunpack.c.0.s8 %v600
        %v602 = vperm.slane %v598, %v601
        %v603 = vrot.slane %v602, 4
        %v604 = vsel %vm550, %v603, %v596
        %v606 = vunpack.c.l.s4 1934713408
        %v607 = vunpack.c.0.s8 %v606
        %v608 = vperm.slane %v604, %v607
        %v609 = vrot.slane %v608, 4
        %v610 = vsel %vm550, 0, %v609
        %v611 = vsel %vm550, %v590, %v583
        %v613 = vunpack.c.l.s4 1983009808
        %v614 = vunpack.c.0.s8 %v613
        %v615 = vperm.slane %v611, %v614
        %v616 = vrot.slane %v591, 4
        %v617 = vsel %vm550, %v616, %v589
        %v619 = vunpack.c.l.s4 1983009808
        %v620 = vunpack.c.0.s8 %v619
        %v621 = vperm.slane %v617, %v620
        %v622 = vrot.slane %v621, 4
        %v623 = vsel %vm550, %v622, %v615
        %v625 = vunpack.c.l.s4 1934713408
        %v626 = vunpack.c.0.s8 %v625
        %v627 = vperm.slane %v623, %v626
        %v628 = vrot.slane %v627, 4
        %v629 = vsel %vm550, 0, %v628
        %v632 = vpack.i.b16 %v627, %v608
        %v633 = vshrl.u32 %v608, 16
        %v634 = vshrl.u32 %v627, 16
        %v635 = vpack.i.b16 %v634, %v633
        %v638 = vpack.i.b16 %v629, %v610
        %v639 = vshrl.u32 %v610, 16
        %v640 = vshrl.u32 %v629, 16
        %v641 = vpack.i.b16 %v640, %v639
        %v642 = vpack.c.bf16 %v516, %v516
        %644 = vrot.lane.b32.xlu0 %v642, 120
        %v645 = vpop.permute.xlu0 %644
        %646 = vrot.lane.b32.xlu0 %v642, 112
        %v647 = vpop.permute.xlu0 %646
        %648 = vrot.lane.b32.xlu0 %v642, 104
        %v649 = vpop.permute.xlu0 %648
        %v652 = vpack.i.b16 %v645, %v642
        %v653 = vshrl.u32 %v642, 16
        %v654 = vshrl.u32 %v645, 16
        %v655 = vpack.i.b16 %v654, %v653
        %v658 = vpack.i.b16 %v649, %v647
        %v659 = vshrl.u32 %v647, 16
        %v660 = vshrl.u32 %v649, 16
        %v661 = vpack.i.b16 %v660, %v659
        %v664 = vunpack.c.l.s4 1983009808
        %v665 = vunpack.c.0.s8 %v664
        %v666 = vperm.slane %v652, %v665
        %v669 = vunpack.c.l.s4 1983009808
        %v670 = vunpack.c.0.s8 %v669
        %v671 = vperm.slane %v658, %v670
        %v672 = vrot.slane %v671, 4
        %v673 = vsel %vm550, %v672, %v666
        %v674 = vrot.slane %v666, 4
        %v675 = vsel %vm550, %v671, %v674
        %v677 = vunpack.c.l.s4 1934713408
        %v678 = vunpack.c.0.s8 %v677
        %v679 = vperm.slane %v673, %v678
        %v681 = vunpack.c.l.s4 1934713408
        %v682 = vunpack.c.0.s8 %v681
        %v683 = vperm.slane %v675, %v682
        %v684 = vrot.slane %v679, 4
        %v685 = vsel %vm550, 0, %v684
        %v686 = vrot.slane %v683, 4
        %v687 = vsel %vm550, 0, %v686
        %v690 = vunpack.c.l.s4 1983009808
        %v691 = vunpack.c.0.s8 %v690
        %v692 = vperm.slane %v655, %v691
        %v695 = vunpack.c.l.s4 1983009808
        %v696 = vunpack.c.0.s8 %v695
        %v697 = vperm.slane %v661, %v696
        %v698 = vrot.slane %v697, 4
        %v699 = vsel %vm550, %v698, %v692
        %v700 = vrot.slane %v692, 4
        %v701 = vsel %vm550, %v697, %v700
        %v703 = vunpack.c.l.s4 1934713408
        %v704 = vunpack.c.0.s8 %v703
        %v705 = vperm.slane %v699, %v704
        %v707 = vunpack.c.l.s4 1934713408
        %v708 = vunpack.c.0.s8 %v707
        %v709 = vperm.slane %v701, %v708
        %v710 = vrot.slane %v705, 4
        %v711 = vsel %vm550, 0, %v710
        %v712 = vrot.slane %v709, 4
        %v713 = vsel %vm550, 0, %v712
        %v714 = vsel %vm550, %v686, %v679
        %v716 = vunpack.c.l.s4 1983009808
        %v717 = vunpack.c.0.s8 %v716
        %v718 = vperm.slane %v714, %v717
        %v719 = vrot.slane %v687, 4
        %v720 = vsel %vm550, %v719, %v685
        %v722 = vunpack.c.l.s4 1983009808
        %v723 = vunpack.c.0.s8 %v722
        %v724 = vperm.slane %v720, %v723
        %v725 = vrot.slane %v724, 4
        %v726 = vsel %vm550, %v725, %v718
        %v728 = vunpack.c.l.s4 1934713408
        %v729 = vunpack.c.0.s8 %v728
        %v730 = vperm.slane %v726, %v729
        %v731 = vrot.slane %v730, 4
        %v732 = vsel %vm550, 0, %v731
        %v733 = vsel %vm550, %v712, %v705
        %v735 = vunpack.c.l.s4 1983009808
        %v736 = vunpack.c.0.s8 %v735
        %v737 = vperm.slane %v733, %v736
        %v738 = vrot.slane %v713, 4
        %v739 = vsel %vm550, %v738, %v711
        %v741 = vunpack.c.l.s4 1983009808
        %v742 = vunpack.c.0.s8 %v741
        %v743 = vperm.slane %v739, %v742
        %v744 = vrot.slane %v743, 4
        %v745 = vsel %vm550, %v744, %v737
        %v747 = vunpack.c.l.s4 1934713408
        %v748 = vunpack.c.0.s8 %v747
        %v749 = vperm.slane %v745, %v748
        %v750 = vrot.slane %v749, 4
        %v751 = vsel %vm550, 0, %v750
        %v754 = vpack.i.b16 %v749, %v730
        %v755 = vshrl.u32 %v730, 16
        %v756 = vshrl.u32 %v749, 16
        %v757 = vpack.i.b16 %v756, %v755
        %v760 = vpack.i.b16 %v751, %v732
        %v761 = vshrl.u32 %v732, 16
        %v762 = vshrl.u32 %v751, 16
        %v763 = vpack.i.b16 %v762, %v761
        %v764 = vld [vmem:[%s3] sm:$0xf]
        %v765 = vld [vmem:[%s3 + $0x4] sm:$0xf]
        %v766 = vld [vmem:[%s3 + $0x8] sm:$0xf]
        %v767 = vld [vmem:[%s3 + $0xc] sm:$0xf]
        %v768 = vperm.slane %v417, 2
        %v773 = vunpack.c.l.b16 %v764
        %v774 = vunpack.c.l.b16 %v765
        %v775 = vunpack.c.l.b16 %v766
        %v776 = vunpack.c.l.b16 %v767
        %v777 = vpack.c.b16 %v774, %v773
        %v778 = vpack.c.b16 %v776, %v775
        %781 = vmatpush.bf16.msra.mxu0 0
        %782 = vmatpush.bf16.msra.mxu0 0
        %783 = vmatpush.bf16.msra.mxu0 0
        %784 = vmatpush.bf16.msra.mxu0 0
        %785 = vmatpush.bf16.msra.mxu0 0
        %786 = vmatpush.bf16.msra.mxu0 0
        %787 = vmatpush.bf16.msra.mxu0 %v778
        %788 = vmatpush.bf16.msra.mxu0 %v777
        %789 = vmatmul.bf16.gmra.mxu0 %v474
        %v790 = vpop.f32.mrf.mxu0
        %v791 = vadd.f32 %v768, %v790
        %v792 = vpop.f32.mrf.mxu0
        %793 = vdwg.mxu0
        %v794 = vmul.f32 %v791, 0.35355338
        %v795 = vpack.c.bf16 %v794, %v794
        %797 = vrot.lane.b32.xlu0 %v795, 120
        %v798 = vpop.permute.xlu0 %797
        %799 = vrot.lane.b32.xlu0 %v795, 112
        %v800 = vpop.permute.xlu0 %799
        %801 = vrot.lane.b32.xlu0 %v795, 104
        %v802 = vpop.permute.xlu0 %801
        %v805 = vpack.i.b16 %v798, %v795
        %v806 = vshrl.u32 %v795, 16
        %v807 = vshrl.u32 %v798, 16
        %v808 = vpack.i.b16 %v807, %v806
        %v811 = vpack.i.b16 %v802, %v800
        %v812 = vshrl.u32 %v800, 16
        %v813 = vshrl.u32 %v802, 16
        %v814 = vpack.i.b16 %v813, %v812
        %v817 = vunpack.c.l.s4 1983009808
        %v818 = vunpack.c.0.s8 %v817
        %v819 = vperm.slane %v805, %v818
        %v822 = vunpack.c.l.s4 1983009808
        %v823 = vunpack.c.0.s8 %v822
        %v824 = vperm.slane %v811, %v823
        %v825 = vrot.slane %v824, 4
        %v826 = vsel %vm550, %v825, %v819
        %v827 = vrot.slane %v819, 4
        %v828 = vsel %vm550, %v824, %v827
        %v830 = vunpack.c.l.s4 1934713408
        %v831 = vunpack.c.0.s8 %v830
        %v832 = vperm.slane %v826, %v831
        %v834 = vunpack.c.l.s4 1934713408
        %v835 = vunpack.c.0.s8 %v834
        %v836 = vperm.slane %v828, %v835
        %v837 = vrot.slane %v832, 4
        %v838 = vsel %vm550, 0, %v837
        %v839 = vrot.slane %v836, 4
        %v840 = vsel %vm550, 0, %v839
        %v843 = vunpack.c.l.s4 1983009808
        %v844 = vunpack.c.0.s8 %v843
        %v845 = vperm.slane %v808, %v844
        %v848 = vunpack.c.l.s4 1983009808
        %v849 = vunpack.c.0.s8 %v848
        %v850 = vperm.slane %v814, %v849
        %v851 = vrot.slane %v850, 4
        %v852 = vsel %vm550, %v851, %v845
        %v853 = vrot.slane %v845, 4
        %v854 = vsel %vm550, %v850, %v853
        %v856 = vunpack.c.l.s4 1934713408
        %v857 = vunpack.c.0.s8 %v856
        %v858 = vperm.slane %v852, %v857
        %v860 = vunpack.c.l.s4 1934713408
        %v861 = vunpack.c.0.s8 %v860
        %v862 = vperm.slane %v854, %v861
        %v863 = vrot.slane %v858, 4
        %v864 = vsel %vm550, 0, %v863
        %v865 = vrot.slane %v862, 4
        %v866 = vsel %vm550, 0, %v865
        %v867 = vsel %vm550, %v839, %v832
        %v869 = vunpack.c.l.s4 1983009808
        %v870 = vunpack.c.0.s8 %v869
        %v871 = vperm.slane %v867, %v870
        %v872 = vrot.slane %v840, 4
        %v873 = vsel %vm550, %v872, %v838
        %v875 = vunpack.c.l.s4 1983009808
        %v876 = vunpack.c.0.s8 %v875
        %v877 = vperm.slane %v873, %v876
        %v878 = vrot.slane %v877, 4
        %v879 = vsel %vm550, %v878, %v871
        %v881 = vunpack.c.l.s4 1934713408
        %v882 = vunpack.c.0.s8 %v881
        %v883 = vperm.slane %v879, %v882
        %v884 = vrot.slane %v883, 4
        %v885 = vsel %vm550, 0, %v884
        %v886 = vsel %vm550, %v865, %v858
        %v888 = vunpack.c.l.s4 1983009808
        %v889 = vunpack.c.0.s8 %v888
        %v890 = vperm.slane %v886, %v889
        %v891 = vrot.slane %v866, 4
        %v892 = vsel %vm550, %v891, %v864
        %v894 = vunpack.c.l.s4 1983009808
        %v895 = vunpack.c.0.s8 %v894
        %v896 = vperm.slane %v892, %v895
        %v897 = vrot.slane %v896, 4
        %v898 = vsel %vm550, %v897, %v890
        %v900 = vunpack.c.l.s4 1934713408
        %v901 = vunpack.c.0.s8 %v900
        %v902 = vperm.slane %v898, %v901
        %v903 = vrot.slane %v902, 4
        %v904 = vsel %vm550, 0, %v903
        %v907 = vpack.i.b16 %v902, %v883
        %v908 = vshrl.u32 %v883, 16
        %v909 = vshrl.u32 %v902, 16
        %v910 = vpack.i.b16 %v909, %v908
        %v913 = vpack.i.b16 %v904, %v885
        %v914 = vshrl.u32 %v885, 16
        %v915 = vshrl.u32 %v904, 16
        %v916 = vpack.i.b16 %v915, %v914
        %vm917 = vcmask 64512
        %v919 = vsel %vm917, %v907, 0
        %v922 = vsel %vm917, %v632, 0
        %924 = vmatpush.bf16.xpose.msra.mxu0 0
        %925 = vmatpush.bf16.xpose.msra.mxu0 0
        %926 = vmatpush.bf16.xpose.msra.mxu0 0
        %927 = vmatpush.bf16.xpose.msra.mxu0 0
        %928 = vmatpush.bf16.xpose.msra.mxu0 0
        %929 = vmatpush.bf16.xpose.msra.mxu0 0
        %930 = vmatpush.bf16.xpose.msra.mxu0 0
        %931 = vmatpush.bf16.xpose.msra.mxu0 %v922
        %932 = vmatmul.bf16.gmra.mxu0 %v919
        %v933 = vpop.f32.mrf.mxu0
        %v934 = vadd.f32 0.0, %v933
        %v935 = vpop.f32.mrf.mxu0
        %936 = vdwg.mxu0
        %v938 = vsel %vm917, %v910, 0
        %v941 = vsel %vm917, %v635, 0
        %943 = vmatpush.bf16.xpose.msra.mxu0 0
        %944 = vmatpush.bf16.xpose.msra.mxu0 0
        %945 = vmatpush.bf16.xpose.msra.mxu0 0
        %946 = vmatpush.bf16.xpose.msra.mxu0 0
        %947 = vmatpush.bf16.xpose.msra.mxu0 0
        %948 = vmatpush.bf16.xpose.msra.mxu0 0
        %949 = vmatpush.bf16.xpose.msra.mxu0 0
        %950 = vmatpush.bf16.xpose.msra.mxu0 %v941
        %951 = vmatmul.bf16.gmra.mxu0 %v938
        %v952 = vpop.f32.mrf.mxu0
        %v953 = vadd.f32 0.0, %v952
        %v954 = vpop.f32.mrf.mxu0
        %955 = vdwg.mxu0
        %v957 = vsel %vm917, %v913, 0
        %v960 = vsel %vm917, %v638, 0
        %962 = vmatpush.bf16.xpose.msra.mxu0 0
        %963 = vmatpush.bf16.xpose.msra.mxu0 0
        %964 = vmatpush.bf16.xpose.msra.mxu0 0
        %965 = vmatpush.bf16.xpose.msra.mxu0 0
        %966 = vmatpush.bf16.xpose.msra.mxu0 0
        %967 = vmatpush.bf16.xpose.msra.mxu0 0
        %968 = vmatpush.bf16.xpose.msra.mxu0 0
        %969 = vmatpush.bf16.xpose.msra.mxu0 %v960
        %970 = vmatmul.bf16.gmra.mxu0 %v957
        %v971 = vpop.f32.mrf.mxu0
        %v972 = vadd.f32 0.0, %v971
        %v973 = vpop.f32.mrf.mxu0
        %974 = vdwg.mxu0
        %v976 = vsel %vm917, %v916, 0
        %v979 = vsel %vm917, %v641, 0
        %981 = vmatpush.bf16.xpose.msra.mxu0 0
        %982 = vmatpush.bf16.xpose.msra.mxu0 0
        %983 = vmatpush.bf16.xpose.msra.mxu0 0
        %984 = vmatpush.bf16.xpose.msra.mxu0 0
        %985 = vmatpush.bf16.xpose.msra.mxu0 0
        %986 = vmatpush.bf16.xpose.msra.mxu0 0
        %987 = vmatpush.bf16.xpose.msra.mxu0 0
        %988 = vmatpush.bf16.xpose.msra.mxu0 %v979
        %989 = vmatmul.bf16.gmra.mxu0 %v976
        %v990 = vpop.f32.mrf.mxu0
        %v991 = vadd.f32 0.0, %v990
        %v992 = vpop.f32.mrf.mxu0
        %993 = vdwg.mxu0
        %v994 = vsel %vm917, %v934, -inf
        %995 = vmax.xlane.f32.xlu0 %v994
        %v996 = vpop.xlane.xlu0 %995
        %v997 = vsel %vm917, %v953, -inf
        %998 = vmax.xlane.f32.xlu0 %v997
        %v999 = vpop.xlane.xlu0 %998
        %v1000 = vsel %vm917, %v972, -inf
        %1001 = vmax.xlane.f32.xlu0 %v1000
        %v1002 = vpop.xlane.xlu0 %1001
        %v1003 = vsel %vm917, %v991, -inf
        %1004 = vmax.xlane.f32.xlu0 %v1003
        %v1005 = vpop.xlane.xlu0 %1004
        %v1006 = vsub.f32 %v934, %v996
        %v1007 = vsub.f32 %v953, %v999
        %v1008 = vsub.f32 %v972, %v1002
        %v1009 = vsub.f32 %v991, %v1005
        %v1010 = vmul.f32 %v1006, 1.442695
        %v1011 = vpow.pop %v1010
        %v1012 = vmul.f32 %v1007, 1.442695
        %v1013 = vpow.pop %v1012
        %v1014 = vmul.f32 %v1008, 1.442695
        %v1015 = vpow.pop %v1014
        %v1016 = vmul.f32 %v1009, 1.442695
        %v1017 = vpow.pop %v1016
        %v1018 = vsel %vm917, %v1011, 0.0
        %1019 = vadd.xlane.f32.xlu0 %v1018
        %v1020 = vpop.xlane.xlu0 %1019
        %v1021 = vsel %vm917, %v1013, 0.0
        %1022 = vadd.xlane.f32.xlu0 %v1021
        %v1023 = vpop.xlane.xlu0 %1022
        %v1024 = vsel %vm917, %v1015, 0.0
        %1025 = vadd.xlane.f32.xlu0 %v1024
        %v1026 = vpop.xlane.xlu0 %1025
        %v1027 = vsel %vm917, %v1017, 0.0
        %1028 = vadd.xlane.f32.xlu0 %v1027
        %v1029 = vpop.xlane.xlu0 %1028
        %v1030 = vrcp.pop %v1020
        %v1031 = vrcp.pop %v1023
        %v1032 = vrcp.pop %v1026
        %v1033 = vrcp.pop %v1029
        %v1034 = vmul.f32 %v1011, %v1030
        %v1035 = vmul.f32 %v1013, %v1031
        %v1036 = vmul.f32 %v1015, %v1032
        %v1037 = vmul.f32 %v1017, %v1033
        %v1038 = vpack.c.bf16 %v1034, %v1034
        %v1039 = vpack.c.bf16 %v1035, %v1035
        %v1040 = vpack.c.bf16 %v1036, %v1036
        %v1041 = vpack.c.bf16 %v1037, %v1037
        %vm1042 = vcmask 60416
        %1043 = vst.msk [vmem:[%s411] sm:$0xf] %vm1042, %v1038
        %1044 = vst.msk [vmem:[%s411 + $0x4] sm:$0xf] %vm1042, %v1039
        %1045 = vst.msk [vmem:[%s411 + $0x8] sm:$0xf] %vm1042, %v1040
        %1046 = vst.msk [vmem:[%s411 + $0xc] sm:$0xf] %vm1042, %v1041
        %v1048 = vsel %vm917, %v1038, 0
        %vm1050 = vcmask 1043456
        %v1052 = vsel %vm1050, %v754, 0
        %1054 = vmatpush.bf16.msra.mxu0 0
        %1055 = vmatpush.bf16.msra.mxu0 0
        %1056 = vmatpush.bf16.msra.mxu0 0
        %1057 = vmatpush.bf16.msra.mxu0 0
        %1058 = vmatpush.bf16.msra.mxu0 0
        %1059 = vmatpush.bf16.msra.mxu0 0
        %1060 = vmatpush.bf16.msra.mxu0 0
        %1061 = vmatpush.bf16.msra.mxu0 %v1052
        %1062 = vmatmul.bf16.gmra.mxu0 %v1048
        %v1063 = vpop.f32.mrf.mxu0
        %v1064 = vadd.f32 0.0, %v1063
        %v1065 = vpop.f32.mrf.mxu0
        %1066 = vdwg.mxu0
        %v1068 = vsel %vm917, %v1039, 0
        %v1071 = vsel %vm1050, %v757, 0
        %1073 = vmatpush.bf16.msra.mxu0 0
        %1074 = vmatpush.bf16.msra.mxu0 0
        %1075 = vmatpush.bf16.msra.mxu0 0
        %1076 = vmatpush.bf16.msra.mxu0 0
        %1077 = vmatpush.bf16.msra.mxu0 0
        %1078 = vmatpush.bf16.msra.mxu0 0
        %1079 = vmatpush.bf16.msra.mxu0 0
        %1080 = vmatpush.bf16.msra.mxu0 %v1071
        %1081 = vmatmul.bf16.gmra.mxu0 %v1068
        %v1082 = vpop.f32.mrf.mxu0
        %v1083 = vadd.f32 0.0, %v1082
        %v1084 = vpop.f32.mrf.mxu0
        %1085 = vdwg.mxu0
        %v1087 = vsel %vm917, %v1040, 0
        %v1090 = vsel %vm1050, %v760, 0
        %1092 = vmatpush.bf16.msra.mxu0 0
        %1093 = vmatpush.bf16.msra.mxu0 0
        %1094 = vmatpush.bf16.msra.mxu0 0
        %1095 = vmatpush.bf16.msra.mxu0 0
        %1096 = vmatpush.bf16.msra.mxu0 0
        %1097 = vmatpush.bf16.msra.mxu0 0
        %1098 = vmatpush.bf16.msra.mxu0 0
        %1099 = vmatpush.bf16.msra.mxu0 %v1090
        %1100 = vmatmul.bf16.gmra.mxu0 %v1087
        %v1101 = vpop.f32.mrf.mxu0
        %v1102 = vadd.f32 0.0, %v1101
        %v1103 = vpop.f32.mrf.mxu0
        %1104 = vdwg.mxu0
        %v1106 = vsel %vm917, %v1041, 0
        %v1109 = vsel %vm1050, %v763, 0
        %1111 = vmatpush.bf16.msra.mxu0 0
        %1112 = vmatpush.bf16.msra.mxu0 0
        %1113 = vmatpush.bf16.msra.mxu0 0
        %1114 = vmatpush.bf16.msra.mxu0 0
        %1115 = vmatpush.bf16.msra.mxu0 0
        %1116 = vmatpush.bf16.msra.mxu0 0
        %1117 = vmatpush.bf16.msra.mxu0 0
        %1118 = vmatpush.bf16.msra.mxu0 %v1109
        %1119 = vmatmul.bf16.gmra.mxu0 %v1106
        %v1120 = vpop.f32.mrf.mxu0
        %v1121 = vadd.f32 0.0, %v1120
        %v1122 = vpop.f32.mrf.mxu0
        %1123 = vdwg.mxu0
        %v1124 = vpack.c.bf16 %v1064, %v1064
        %v1125 = vpack.c.bf16 %v1083, %v1083
        %v1126 = vpack.c.bf16 %v1102, %v1102
        %v1127 = vpack.c.bf16 %v1121, %v1121
        %v1130 = vpack.i.b16 %v1125, %v1124
        %v1131 = vshrl.u32 %v1124, 16
        %v1132 = vshrl.u32 %v1125, 16
        %v1133 = vpack.i.b16 %v1132, %v1131
        %v1136 = vpack.i.b16 %v1127, %v1126
        %v1137 = vshrl.u32 %v1126, 16
        %v1138 = vshrl.u32 %v1127, 16
        %v1139 = vpack.i.b16 %v1138, %v1137
        %v1142 = vunpack.c.l.s4 1983009808
        %v1143 = vunpack.c.0.s8 %v1142
        %v1144 = vperm.slane %v1130, %v1143
        %v1147 = vunpack.c.l.s4 1983009808
        %v1148 = vunpack.c.0.s8 %v1147
        %v1149 = vperm.slane %v1136, %v1148
        %v1150 = vrot.slane %v1149, 4
        %v1151 = vsel %vm550, %v1150, %v1144
        %v1152 = vrot.slane %v1144, 4
        %v1153 = vsel %vm550, %v1149, %v1152
        %v1155 = vunpack.c.l.s4 1934713408
        %v1156 = vunpack.c.0.s8 %v1155
        %v1157 = vperm.slane %v1151, %v1156
        %v1159 = vunpack.c.l.s4 1934713408
        %v1160 = vunpack.c.0.s8 %v1159
        %v1161 = vperm.slane %v1153, %v1160
        %v1162 = vrot.slane %v1157, 4
        %v1163 = vsel %vm550, 0, %v1162
        %v1164 = vrot.slane %v1161, 4
        %v1165 = vsel %vm550, 0, %v1164
        %v1168 = vunpack.c.l.s4 1983009808
        %v1169 = vunpack.c.0.s8 %v1168
        %v1170 = vperm.slane %v1133, %v1169
        %v1173 = vunpack.c.l.s4 1983009808
        %v1174 = vunpack.c.0.s8 %v1173
        %v1175 = vperm.slane %v1139, %v1174
        %v1176 = vrot.slane %v1175, 4
        %v1177 = vsel %vm550, %v1176, %v1170
        %v1178 = vrot.slane %v1170, 4
        %v1179 = vsel %vm550, %v1175, %v1178
        %v1181 = vunpack.c.l.s4 1934713408
        %v1182 = vunpack.c.0.s8 %v1181
        %v1183 = vperm.slane %v1177, %v1182
        %v1185 = vunpack.c.l.s4 1934713408
        %v1186 = vunpack.c.0.s8 %v1185
        %v1187 = vperm.slane %v1179, %v1186
        %v1188 = vrot.slane %v1183, 4
        %v1189 = vsel %vm550, 0, %v1188
        %v1190 = vrot.slane %v1187, 4
        %v1191 = vsel %vm550, 0, %v1190
        %v1192 = vsel %vm550, %v1164, %v1157
        %v1194 = vunpack.c.l.s4 1983009808
        %v1195 = vunpack.c.0.s8 %v1194
        %v1196 = vperm.slane %v1192, %v1195
        %v1197 = vrot.slane %v1165, 4
        %v1198 = vsel %vm550, %v1197, %v1163
        %v1200 = vunpack.c.l.s4 1983009808
        %v1201 = vunpack.c.0.s8 %v1200
        %v1202 = vperm.slane %v1198, %v1201
        %v1203 = vrot.slane %v1202, 4
        %v1204 = vsel %vm550, %v1203, %v1196
        %v1206 = vunpack.c.l.s4 1934713408
        %v1207 = vunpack.c.0.s8 %v1206
        %v1208 = vperm.slane %v1204, %v1207
        %v1209 = vrot.slane %v1208, 4
        %v1210 = vsel %vm550, 0, %v1209
        %v1211 = vsel %vm550, %v1190, %v1183
        %v1213 = vunpack.c.l.s4 1983009808
        %v1214 = vunpack.c.0.s8 %v1213
        %v1215 = vperm.slane %v1211, %v1214
        %v1216 = vrot.slane %v1191, 4
        %v1217 = vsel %vm550, %v1216, %v1189
        %v1219 = vunpack.c.l.s4 1983009808
        %v1220 = vunpack.c.0.s8 %v1219
        %v1221 = vperm.slane %v1217, %v1220
        %v1222 = vrot.slane %v1221, 4
        %v1223 = vsel %vm550, %v1222, %v1215
        %v1225 = vunpack.c.l.s4 1934713408
        %v1226 = vunpack.c.0.s8 %v1225
        %v1227 = vperm.slane %v1223, %v1226
        %v1228 = vrot.slane %v1227, 4
        %v1229 = vsel %vm550, 0, %v1228
        %v1232 = vpack.i.b16 %v1227, %v1208
        %v1233 = vshrl.u32 %v1208, 16
        %v1234 = vshrl.u32 %v1227, 16
        %v1235 = vpack.i.b16 %v1234, %v1233
        %v1238 = vpack.i.b16 %v1229, %v1210
        %v1239 = vshrl.u32 %v1210, 16
        %v1240 = vshrl.u32 %v1229, 16
        %v1241 = vpack.i.b16 %v1240, %v1239
        %v1242 = vunpack.c.l.b16 %v1235
        %v1243 = vpack.c.b16 %v1242, %v1242
        %1244 = vrot.lane.b32.xlu0 %v1243, 8
        %v1245 = vpop.permute.xlu0 %1244
        %v1246 = vunpack.c.l.b16 %v1238
        %v1247 = vpack.c.b16 %v1246, %v1246
        %1248 = vrot.lane.b32.xlu0 %v1247, 16
        %v1249 = vpop.permute.xlu0 %1248
        %v1250 = vunpack.c.l.b16 %v1241
        %v1251 = vpack.c.b16 %v1250, %v1250
        %1252 = vrot.lane.b32.xlu0 %v1251, 24
        %v1253 = vpop.permute.xlu0 %1252
        %v1256 = vsel %vm917, %v1232, %v1245
        %vm1257 = vcmask 130048
        %v1259 = vsel %vm1257, %v1256, %v1249
        %vm1260 = vcmask 195584
        %v1262 = vsel %vm1260, %v1259, %v1253
        %v1263 = vld [vmem:[#allocation2] sm:$0xf]
        %v1264 = vld [vmem:[#allocation2 + $0x4] sm:$0xf]
        %v1265 = vld [vmem:[#allocation2 + $0x8] sm:$0xf]
        %v1266 = vld [vmem:[#allocation2 + $0xc] sm:$0xf]
        %v1267 = vperm.slane %v417, 5
        %v1272 = vunpack.c.l.b16 %v1263
        %v1273 = vunpack.c.l.b16 %v1264
        %v1274 = vunpack.c.l.b16 %v1265
        %v1275 = vunpack.c.l.b16 %v1266
        %v1276 = vpack.c.b16 %v1273, %v1272
        %v1277 = vpack.c.b16 %v1275, %v1274
        %v1280 = vsel %vm421, %v1262, 0
        %1282 = vmatpush.bf16.msra.mxu0 0
        %1283 = vmatpush.bf16.msra.mxu0 0
        %1284 = vmatpush.bf16.msra.mxu0 0
        %1285 = vmatpush.bf16.msra.mxu0 0
        %1286 = vmatpush.bf16.msra.mxu0 0
        %1287 = vmatpush.bf16.msra.mxu0 0
        %1288 = vmatpush.bf16.msra.mxu0 %v1277
        %1289 = vmatpush.bf16.msra.mxu0 %v1276
        %1290 = vmatmul.bf16.gmra.mxu0 %v1280
        %v1291 = vpop.f32.mrf.mxu0
        %v1292 = vadd.f32 %v1267, %v1291
        %v1293 = vpop.f32.mrf.mxu0
        %1294 = vdwg.mxu0
        %v1295 = vadd.f32 %v420, %v1292
        %v1296 = vsel %vm421, %v1295, 0.0
        %1297 = vadd.xlane.f32.xlu0 %v1296
        %v1298 = vpop.xlane.xlu0 %1297
        %v1299 = vmul.f32 %v1298, %v431
        %v1300 = vsub.f32 %v1295, %v1299
        %v1301 = vmul.f32 %v1300, %v1300
        %v1302 = vsel %vm421, %v1301, 0.0
        %1303 = vadd.xlane.f32.xlu0 %v1302
        %v1304 = vpop.xlane.xlu0 %1303
        %v1305 = vmul.f32 %v1304, %v431
        %v1306 = vadd.f32 %v1305, 1e-06
        %v1307 = vrsqrt.pop %v1306
        %v1308 = vmul.f32 %v1307, %v1306
        %v1309 = vmul.f32 %v1308, %v1307
        %v1310 = vmul.f32 0.5, %v1309
        %v1311 = vsub.f32 1.5, %v1310
        %v1312 = vmul.f32 %v1307, %v1311
        %vm1313 = vweird.f32 %v1306
        %vm1314 = vweird.f32 %v1307
        %vm1315 = vmor %vm1313, %vm1314
        %v1316 = vsel %vm1315, %v1307, %v1312
        %v1317 = vmul.f32 %v1300, %v1316
        %v1318 = vperm.slane %v417, 6
        %v1319 = vmul.f32 %v1317, %v1318
        %v1320 = vperm.slane %v417, 7
        %v1321 = vadd.f32 %v1319, %v1320
        %v1322 = vpack.c.bf16 %v1321, %v1321
        %v1323 = vld [vmem:[#allocation5] sm:$0xf]
        %v1324 = vld [vmem:[#allocation5 + $0x4] sm:$0xf]
        %v1325 = vld [vmem:[#allocation5 + $0x8] sm:$0xf]
        %v1326 = vld [vmem:[#allocation5 + $0xc] sm:$0xf]
        %v1328 = vperm.slane %v419, 0
        %v1334 = vunpack.c.l.b16 %v1323
        %v1335 = vunpack.c.l.b16 %v1324
        %v1336 = vunpack.c.l.b16 %v1325
        %v1337 = vunpack.c.l.b16 %v1326
        %v1338 = vpack.c.b16 %v1335, %v1334
        %v1339 = vpack.c.b16 %v1337, %v1336
        %v1343 = vsel %vm421, %v1322, 0
        %1345 = vmatpush.bf16.msra.mxu0 0
        %1346 = vmatpush.bf16.msra.mxu0 0
        %1347 = vmatpush.bf16.msra.mxu0 0
        %1348 = vmatpush.bf16.msra.mxu0 0
        %1349 = vmatpush.bf16.msra.mxu0 0
        %1350 = vmatpush.bf16.msra.mxu0 0
        %1351 = vmatpush.bf16.msra.mxu0 %v1339
        %1352 = vmatpush.bf16.msra.mxu0 %v1338
        %1353 = vmatmul.bf16.gmra.mxu0 %v1343
        %v1354 = vpop.f32.mrf.mxu0
        %v1355 = vadd.f32 %v1328, %v1354
        %v1356 = vpop.f32.mrf.mxu0
        %1357 = vdwg.mxu0
        %v1358 = vmul.f32 %v1355, 0.5
        %v1359 = vmul.f32 %v1355, 0.044715
        %v1360 = vmul.f32 %v1359, %v1355
        %v1361 = vmul.f32 %v1360, %v1355
        %v1362 = vadd.f32 %v1355, %v1361
        %v1363 = vmul.f32 %v1362, 0.7978846
        %v1364 = vtanh.pop %v1363
        %v1365 = vadd.f32 %v1364, 1.0
        %v1366 = vmul.f32 %v1358, %v1365
        %v1367 = vpack.c.bf16 %v1366, %v1366
        %v1368 = vld [vmem:[%s8] sm:$0xf]
        %v1369 = vld [vmem:[%s8 + $0x4] sm:$0xf]
        %v1370 = vld [vmem:[%s8 + $0x8] sm:$0xf]
        %v1371 = vld [vmem:[%s8 + $0xc] sm:$0xf]
        %v1372 = vld [vmem:[%s8 + $0x10] sm:$0xf]
        %v1373 = vld [vmem:[%s8 + $0x14] sm:$0xf]
        %v1374 = vld [vmem:[%s8 + $0x18] sm:$0xf]
        %v1375 = vld [vmem:[%s8 + $0x1c] sm:$0xf]
        %v1376 = vld [vmem:[%s8 + $0x20] sm:$0xf]
        %v1377 = vld [vmem:[%s8 + $0x24] sm:$0xf]
        %v1378 = vld [vmem:[%s8 + $0x28] sm:$0xf]
        %v1379 = vld [vmem:[%s8 + $0x2c] sm:$0xf]
        %v1380 = vld [vmem:[%s8 + $0x30] sm:$0xf]
        %v1381 = vld [vmem:[%s8 + $0x34] sm:$0xf]
        %v1382 = vld [vmem:[%s8 + $0x38] sm:$0xf]
        %v1383 = vld [vmem:[%s8 + $0x3c] sm:$0xf]
        %v1384 = vperm.slane %v418, 0
        %v1401 = vunpack.c.l.b16 %v1368
        %v1402 = vunpack.c.l.b16 %v1369
        %v1403 = vunpack.c.l.b16 %v1370
        %v1404 = vunpack.c.l.b16 %v1371
        %v1405 = vunpack.c.l.b16 %v1372
        %v1406 = vunpack.c.l.b16 %v1373
        %v1407 = vunpack.c.l.b16 %v1374
        %v1408 = vunpack.c.l.b16 %v1375
        %v1409 = vunpack.c.l.b16 %v1376
        %v1410 = vunpack.c.l.b16 %v1377
        %v1411 = vunpack.c.l.b16 %v1378
        %v1412 = vunpack.c.l.b16 %v1379
        %v1413 = vunpack.c.l.b16 %v1380
        %v1414 = vunpack.c.l.b16 %v1381
        %v1415 = vunpack.c.l.b16 %v1382
        %v1416 = vunpack.c.l.b16 %v1383
        %v1417 = vpack.c.b16 %v1402, %v1401
        %v1418 = vpack.c.b16 %v1404, %v1403
        %v1419 = vpack.c.b16 %v1406, %v1405
        %v1420 = vpack.c.b16 %v1408, %v1407
        %v1421 = vpack.c.b16 %v1410, %v1409
        %v1422 = vpack.c.b16 %v1412, %v1411
        %v1423 = vpack.c.b16 %v1414, %v1413
        %v1424 = vpack.c.b16 %v1416, %v1415
        %1433 = vmatpush.bf16.msra.mxu0 %v1424
        %1434 = vmatpush.bf16.msra.mxu0 %v1423
        %1435 = vmatpush.bf16.msra.mxu0 %v1422
        %1436 = vmatpush.bf16.msra.mxu0 %v1421
        %1437 = vmatpush.bf16.msra.mxu0 %v1420
        %1438 = vmatpush.bf16.msra.mxu0 %v1419
        %1439 = vmatpush.bf16.msra.mxu0 %v1418
        %1440 = vmatpush.bf16.msra.mxu0 %v1417
        %1441 = vmatmul.bf16.gmra.mxu0 %v1367
        %v1442 = vpop.f32.mrf.mxu0
        %v1443 = vadd.f32 %v1384, %v1442
        %v1444 = vpop.f32.mrf.mxu0
        %1445 = vdwg.mxu0
        %v1446 = vadd.f32 %v1295, %v1443
        %1447 = vst.msk [vmem:[%s404] sm:$0xff] %vm421, %v1446
        %s1448 = sand.u32 %s246, 1
        %s1449 = scalar_lea.sflag [#allocation4], %s1448
        %s1450 = sand.u32 %s246, 1
        %s1451 = smul.addr %s1450, 8
        %s1452 = scalar_lea.vmem [#allocation7], %s1451
        %s1453 = sand.u32 %s274, 1
        %s1454 = scalar_lea.sflag [#allocation9], %s1453
        %s1455 = sand.u32 %s274, 1
        %s1456 = smul.addr %s1455, 16
        %s1457 = scalar_lea.vmem [#allocation8], %s1456
        // Predicated region
        $region65: #{tpu_custom_call.1} parent=55 // pred_check
          %p1458 = pneg %p256
        $region66: #{tpu_custom_call.1} parent=55 // pred_check_branch
          %1460 = sbr.rel (%p1458) target = $region68
        $region67: #{tpu_custom_call.1} parent=55 // pred_region
          %1462 = vsyncadd %s1449, 0
          %s1463 = sadd.s32 %s35, %s34
          %s1464 = smul.addr %s1463, 8
          %s1465 = scalar_lea.hbm %s9, %s1464
          %s1467 = sshll.u32 %s1452, 4
          %s1468 = int_to_ptr.vmem [resolvable:$true] %s1467
          %s1469 = sshll.u32 %s1465, 4
          %s1470 = int_to_ptr.hbm [resolvable:$true] %s1469
          %1472 = dma.vmem_to_hbm [thread:$0]  %s1468, 128, %s1470, %s1449
        $region68: #{tpu_custom_call.1} parent=55 // pred_fallthru
          _
        // Predicated region
        $region69: #{tpu_custom_call.1} parent=55 // pred_check
          %p1473 = pneg %p284
        $region70: #{tpu_custom_call.1} parent=55 // pred_check_branch
          %1475 = sbr.rel (%p1473) target = $region72
        $region71: #{tpu_custom_call.1} parent=55 // pred_region
          %1477 = vsyncadd %s1454, 0
          %s1478 = smul.addr %s34, 4
          %s1479 = sadd.s32 %s35, %s1478
          %s1480 = smul.addr %s1479, 4
          %s1481 = scalar_lea.hbm %s10, %s1480
          %s1482 = sshll.u32 %s1457, 4
          %s1483 = int_to_ptr.vmem [resolvable:$true] %s1482
          %s1484 = sshll.u32 %s1481, 4
          %s1485 = int_to_ptr.hbm [resolvable:$true] %s1484
          %1490 = dma.vmem_to_hbm [thread:$0]  %s1483, 256, %s1485, %s1454, 64, 64, 4
        $region72: #{tpu_custom_call.1} parent=55 // pred_fallthru
          _
      $region56: #{tpu_custom_call.1} parent=5 // pred_fallthru
        _
      %p1491 = scmp.le.s32.totalorder 2, %s25
      // Predicated region
      $region73: #{tpu_custom_call.1} parent=5 // pred_check
        %p1492 = pneg %p1491
      $region74: #{tpu_custom_call.1} parent=5 // pred_check_branch
        %1494 = sbr.rel (%p1492) target = $region76
      $region75: #{tpu_custom_call.1} parent=5 // pred_region
        %s1495 = ssub.s32 %s25, 2
        // Predicated region
        $region77: #{tpu_custom_call.1} parent=75 // pred_check
          %p1496 = pneg %p262
        $region78: #{tpu_custom_call.1} parent=75 // pred_check_branch
          %1498 = sbr.rel (%p1496) target = $region80
        $region79: #{tpu_custom_call.1} parent=75 // pred_region
          %s1499 = sand.u32 %s247, 1
          %s1500 = scalar_lea.sflag [#allocation4], %s1499
          %s1501 = sand.u32 %s247, 1
          %s1502 = smul.addr %s1501, 8
          %s1503 = scalar_lea.vmem [#allocation7], %s1502
          %1505 = dma.done %s1500, 128
        $region80: #{tpu_custom_call.1} parent=75 // pred_fallthru
          _
        // Predicated region
        $region81: #{tpu_custom_call.1} parent=75 // pred_check
          %p1506 = pneg %p290
        $region82: #{tpu_custom_call.1} parent=75 // pred_check_branch
          %1508 = sbr.rel (%p1506) target = $region84
        $region83: #{tpu_custom_call.1} parent=75 // pred_region
          %s1509 = sand.u32 %s275, 1
          %s1510 = scalar_lea.sflag [#allocation9], %s1509
          %s1511 = sand.u32 %s275, 1
          %s1512 = smul.addr %s1511, 16
          %s1513 = scalar_lea.vmem [#allocation8], %s1512
          %1515 = dma.done %s1510, 256
        $region84: #{tpu_custom_call.1} parent=75 // pred_fallthru
          _
      $region76: #{tpu_custom_call.1} parent=5 // pred_fallthru
        _
    $region6: #{tpu_custom_call.1} parent=1 // loop_footer
      %s29 = sadd.s32 1, %s25
    $region7: #{tpu_custom_call.1} parent=1 // loop_footer_branch
      %24 = sbr.rel target = $region3
    $region8: #{tpu_custom_call.1} parent=1 // loop_exit
      _
    %1516 = vsyncpa [#allocation3], 1
    %s1517 = scalar_lea.sflag [#allocation3], 1
    %1518 = vsyncpa %s1517, 1
    %1519 = vsyncpa [#allocation6], 1
    %1520 = vsyncpa [#allocation4], 1
    %s1521 = scalar_lea.sflag [#allocation4], 1
    %1522 = vsyncpa %s1521, 1
    %1523 = vsyncpa [#allocation9], 1
    %s1524 = scalar_lea.sflag [#allocation9], 1
    %1525 = vsyncpa %s1524, 1

</llo_original>
